<compile_context>
chip_gen: v7x
topology: tpu7x:2x2x1
jax: 0.10.0
libtpu: 0.0.40
codegen_flags: <defaults>
</compile_context>

<pallas_src>
import functools

import jax
import jax.numpy as jnp
import numpy as np
from jax.experimental import pallas as pl
from jax.experimental.pallas import tpu as pltpu


def _round_up(x, m):
    return ((x + m - 1) // m) * m


def _pick_vmem_limit():
    """Per-generation VMEM budget: ~3/4 of physical, capped at 96 MiB.
    v5e/v6e (128 MiB) -> 96 MiB; v7x (64 MiB) -> 48 MiB."""
    try:
        cap = int(pltpu.get_tpu_info().vmem_capacity_bytes)
    except Exception:
        cap = 64 * 1024 * 1024          # conservative fallback (v7x physical)
    return min(96 * 1024 * 1024, (cap * 3) // 4)


def _pick_token_tile(h_block, dtype_bytes, n_pad, vmem_limit):
    """Largest token tile (multiple of 128) fitting the VMEM budget."""
    reserve = 2 * n_pad * h_block * 4 + (2 << 20)          # resident output + slack
    budget = vmem_limit - reserve
    for tt in (2048, 1024, 512, 256, 128):
        need = (2 * tt * h_block * dtype_bytes             # double-buffered x tile
                + 2 * tt * 4                               # double-buffered seq_ids
                + n_pad * tt * 8)                          # in-kernel seg/iota temporaries
        if need <= budget:
            return tt
    return 128


# --------------------------------------------------------------------------
# PoolerHead (normalize / softmax) on a [rows, H] float32 block
# --------------------------------------------------------------------------
def _pooler_head(pooled, *, normalize, softmax):
    if normalize:
        # F.normalize(p=2, dim=-1, eps=1e-12) == x * rsqrt(max(sum(x^2), eps^2))
        sumsq = jnp.sum(pooled * pooled, axis=-1, keepdims=True)
        pooled = pooled * jax.lax.rsqrt(jnp.maximum(sumsq, 1e-24))
    if softmax:
        if pooled.shape[-1] >= 2:
            m = jnp.max(pooled, axis=-1, keepdims=True)
            e = jnp.exp(pooled - m)
            denom = jnp.sum(e, axis=-1, keepdims=True)
            pooled = e * pl.reciprocal(denom, approx=True)   # EUP slot, ~free
        else:
            pooled = jax.nn.sigmoid(pooled)
    return pooled


def _head_kernel(x_ref, o_ref, *, normalize, softmax):
    o_ref[...] = _pooler_head(x_ref[...], normalize=normalize, softmax=softmax)


def _apply_head_pallas(pooled, *, normalize, softmax, vmem_limit):
    """Second pass for the H-split MEAN path (head reduces over full H)."""
    n_pad, H = pooled.shape
    kernel = functools.partial(_head_kernel, normalize=normalize, softmax=softmax)
    return pl.pallas_call(
        kernel,
        out_shape=jax.ShapeDtypeStruct((n_pad, H), jnp.float32),
        grid=(1,),
        in_specs=[pl.BlockSpec((n_pad, H), lambda i: (0, 0))],
        out_specs=pl.BlockSpec((n_pad, H), lambda i: (0, 0)),
        compiler_params=pltpu.CompilerParams(vmem_limit_bytes=vmem_limit),
    )(pooled)


# --------------------------------------------------------------------------
# MEAN pooling: streamed token tiles + segment-matrix matmul on the MXU,
# accumulating directly into the resident output block.
# --------------------------------------------------------------------------
def _mean_pool_kernel(seq_ids_ref, x_ref, inv_lens_ref, o_ref, *,
                      token_tile, total_tokens, fuse_head, normalize, softmax,
                      precision):
    """grid = (h_tiles, t_tiles)   semantics = ('parallel', 'arbitrary')

    seq_ids_ref  : VMEM [1, token_tile] int32  (sequence id per token, -1 pad)
    x_ref        : VMEM [token_tile, h_tile]   (streamed tile; tail undefined)
    inv_lens_ref : VMEM [n_pad, 1] f32         (1/len, 0 for padding sequences)
    o_ref        : VMEM [n_pad, h_tile] f32    (resident across the t axis)
    """
    t = pl.program_id(1)

    @pl.when(t == 0)
    def _():
        o_ref[...] = jnp.zeros_like(o_ref)

    n_pad = o_ref.shape[0]

    x = x_ref[...]
    if total_tokens % token_tile != 0:
        # Mask the ragged tail of the last tile: data past T is undefined and
        # seg==0 would not protect against 0*NaN.
        row = jax.lax.broadcasted_iota(jnp.int32, x.shape, 0) + t * token_tile
        x = jnp.where(row < total_tokens, x, jnp.zeros_like(x))

    sid = seq_ids_ref[...]                                            # [1, tT]
    seq_iota = jax.lax.broadcasted_iota(jnp.int32, (n_pad, token_tile), 0)
    seg = (seq_iota == sid).astype(x.dtype)                           # [n_pad, tT]
    o_ref[...] += jnp.dot(seg, x, preferred_element_type=jnp.float32,
                          precision=precision)                        # MXU

    @pl.when(t == pl.num_programs(1) - 1)
    def _():
        pooled = o_ref[...] * inv_lens_ref[...]
        if fuse_head:
            pooled = _pooler_head(pooled, normalize=normalize, softmax=softmax)
        o_ref[...] = pooled


# --------------------------------------------------------------------------
# CLS / LAST pooling: HBM row-gather via manual DMA, double-buffered across
# grid steps, + batched head.
# --------------------------------------------------------------------------
def _gather_pool_kernel(idx_ref, x_hbm, o_ref, rowbuf, sem, *,
                        tile_n, normalize, softmax):
    """grid = (n_pad // tile_n,)   semantics = ('arbitrary',)  (cross-step state)

    idx_ref : SMEM [n_pad] int32 scalar-prefetch, flat token index per sequence
    x_hbm   : HBM  [T, H]  (memory_space=pl.ANY, no auto-DMA)
    o_ref   : VMEM [tile_n, H] f32 output block for this step
    rowbuf  : VMEM [2, tile_n, H] scratch (double-buffered gathered rows)
    sem     : DMA semaphores, shape (2, tile_n)
    """
    i = pl.program_id(0)
    n_steps = pl.num_programs(0)

    def start_fetch(step, slot):
        for r in range(tile_n):                     # static unroll, tile_n small
            src_row = idx_ref[step * tile_n + r]
            pltpu.make_async_copy(
                x_hbm.at[pl.ds(src_row, 1), :],
                rowbuf.at[slot, pl.ds(r, 1), :],
                sem.at[slot, r]).start()

    @pl.when(i == 0)                                # prime slot 0
    def _():
        start_fetch(0, 0)

    @pl.when(i + 1 < n_steps)                       # prefetch next step's rows
    def _():
        start_fetch(i + 1, (i + 1) & 1)

    slot = i & 1
    for r in range(tile_n):                         # wait current slot
        pltpu.make_async_copy(
            x_hbm.at[pl.ds(0, 1), :],
            rowbuf.at[slot, pl.ds(r, 1), :],
            sem.at[slot, r]).wait()

    pooled = rowbuf[slot].astype(jnp.float32)       # [tile_n, H]
    o_ref[...] = _pooler_head(pooled, normalize=normalize, softmax=softmax)


# --------------------------------------------------------------------------
# Wrapper == SimplePooler.forward for packed hidden_states
# --------------------------------------------------------------------------
def simple_pooler(hidden_states, prompt_lens, *, pooling_type="MEAN",
                  normalize=True, softmax=False, token_tile=None,
                  seq_tile=16, h_tile=None):
    """hidden_states: [T_total, H] (any float dtype); prompt_lens: [N] int32.
    Returns [N, H] float32."""
    T, H = hidden_states.shape
    N = prompt_lens.shape[0]

    lens = prompt_lens.astype(jnp.int32)
    ends = jnp.cumsum(lens)
    starts = ends - lens

    vmem_limit = _pick_vmem_limit()

    if pooling_type == "MEAN":
        n_pad = _round_up(N, 8)

        if h_tile is None or h_tile >= H:
            h_tile = H
        else:
            assert H % h_tile == 0 and h_tile % 128 == 0, \
                "h_tile must be a multiple of 128 dividing H"
        h_tiles = H // h_tile

        dtype_bytes = jnp.dtype(hidden_states.dtype).itemsize
        if token_tile is None:
            token_tile = _pick_token_tile(h_tile, dtype_bytes, n_pad, vmem_limit)
        token_tile = min(token_tile, _round_up(T, 8))   # never exceed one tile over T
        t_tiles = max(pl.cdiv(T, token_tile), 1)
        if t_tiles > 1:
            assert token_tile % 128 == 0, "token_tile must be a multiple of 128"
        t_pad = t_tiles * token_tile

        # Per-token sequence ids (tiny [1, t_pad] array; hidden_states itself
        # is never padded or copied).
        tok = jnp.arange(t_pad, dtype=jnp.int32)
        seq_ids = jnp.searchsorted(ends, tok, side="right").astype(jnp.int32)
        seq_ids = jnp.where(tok < T, seq_ids, -1).reshape(1, t_pad)
        inv_lens = jnp.where(lens > 0, 1.0 / lens.astype(jnp.float32), 0.0)
        inv_lens = jnp.pad(inv_lens, (0, n_pad - N)).reshape(n_pad, 1)

        precision = (jax.lax.Precision.HIGHEST
                     if hidden_states.dtype == jnp.float32
                     else jax.lax.Precision.DEFAULT)
        fuse_head = (h_tiles == 1)

        kernel = functools.partial(
            _mean_pool_kernel, token_tile=token_tile, total_tokens=T,
            fuse_head=fuse_head, normalize=normalize, softmax=softmax,
            precision=precision)

        out = pl.pallas_call(
            kernel,
            out_shape=jax.ShapeDtypeStruct((n_pad, H), jnp.float32),
            grid_spec=pltpu.PrefetchScalarGridSpec(
                num_scalar_prefetch=0,
                grid=(h_tiles, t_tiles),
                in_specs=[
                    pl.BlockSpec((1, token_tile), lambda h, t: (0, t)),
                    pl.BlockSpec((token_tile, h_tile), lambda h, t: (t, h)),
                    pl.BlockSpec((n_pad, 1), lambda h, t: (0, 0)),
                ],
                out_specs=pl.BlockSpec((n_pad, h_tile), lambda h, t: (0, h)),
            ),
            compiler_params=pltpu.CompilerParams(
                dimension_semantics=("parallel", "arbitrary"),
                vmem_limit_bytes=vmem_limit),
        )(seq_ids, hidden_states, inv_lens)

        if (not fuse_head) and (normalize or softmax):
            out = _apply_head_pallas(out, normalize=normalize, softmax=softmax,
                                     vmem_limit=vmem_limit)
        return out[:N]

    if pooling_type in ("CLS", "LAST"):
        gidx = starts if pooling_type == "CLS" else ends - 1
        gidx = jnp.clip(gidx, 0, T - 1).astype(jnp.int32)   # zero-len guard
        seq_tile = _round_up(max(8, int(seq_tile)), 8)
        seq_tile = min(seq_tile, _round_up(N, 8))            # avoid over-padding
        n_pad = _round_up(N, seq_tile)
        gidx = jnp.pad(gidx, (0, n_pad - N))                  # pad rows -> idx 0

        kernel = functools.partial(_gather_pool_kernel, tile_n=seq_tile,
                                   normalize=normalize, softmax=softmax)
        out = pl.pallas_call(
            kernel,
            out_shape=jax.ShapeDtypeStruct((n_pad, H), jnp.float32),
            grid_spec=pltpu.PrefetchScalarGridSpec(
                num_scalar_prefetch=1,                        # gather indices
                grid=(n_pad // seq_tile,),
                in_specs=[pl.BlockSpec(memory_space=pl.ANY)],
                out_specs=pl.BlockSpec((seq_tile, H), lambda i, idx: (i, 0)),
                scratch_shapes=[
                    pltpu.VMEM((2, seq_tile, H), hidden_states.dtype),
                    pltpu.SemaphoreType.DMA((2, seq_tile)),
                ],
            ),
            # 'arbitrary': sequential steps keep the cross-step prefetch state
            # (double-buffered rowbuf/sems) safe under any core partitioning.
            compiler_params=pltpu.CompilerParams(
                dimension_semantics=("arbitrary",),
                vmem_limit_bytes=vmem_limit),
        )(gidx, hidden_states)
        return out[:N]

    raise ValueError(f"unsupported pooling_type {pooling_type}")


# --------------------------------------------------------------------------
# demo / self-check
# --------------------------------------------------------------------------
if __name__ == "__main__":
    key = jax.random.PRNGKey(0)
    H = 256
    prompt_lens = jnp.array([7, 13, 24, 9, 18, 11, 30, 5, 16, 22,
                             8, 27, 14, 19, 6, 25, 12, 21, 10, 15],
                            dtype=jnp.int32)            # N = 20 sequences
    T = int(np.asarray(prompt_lens).sum())              # 312 packed tokens
    hidden_states = jax.random.normal(key, (T, H), dtype=jnp.float32)

    # MEAN + normalize: token_tile=128 -> 3 token tiles, ragged tail (mask path)
    out_mean = jax.block_until_ready(
        simple_pooler(hidden_states, prompt_lens, pooling_type="MEAN",
                      normalize=True, softmax=False, token_tile=128))
    # MEAN + normalize with H split in two blocks (v7x-style) -> two-pass head
    out_mean_split = jax.block_until_ready(
        simple_pooler(hidden_states, prompt_lens, pooling_type="MEAN",
                      normalize=True, softmax=False, token_tile=128, h_tile=128))
    # LAST + softmax and CLS + normalize: 2 grid steps -> double-buffered gather
    out_last = jax.block_until_ready(
        simple_pooler(hidden_states, prompt_lens, pooling_type="LAST",
                      normalize=False, softmax=True))
    out_cls = jax.block_until_ready(
        simple_pooler(hidden_states, prompt_lens, pooling_type="CLS",
                      normalize=True, softmax=False))

    # pure-numpy references of the same semantics
    lens_np = np.asarray(prompt_lens)
    ends_np = np.cumsum(lens_np)
    starts_np = ends_np - lens_np
    hs = np.asarray(hidden_states, dtype=np.float64)

    def np_norm(v):
        n = np.linalg.norm(v, axis=-1, keepdims=True)
        return v / np.maximum(n, 1e-12)

    def np_softmax(v):
        e = np.exp(v - v.max(axis=-1, keepdims=True))
        return e / e.sum(axis=-1, keepdims=True)

    ref_mean = np_norm(np.stack([hs[s:e].mean(axis=0)
                                 for s, e in zip(starts_np, ends_np)]))
    ref_last = np_softmax(hs[ends_np - 1])
    ref_cls = np_norm(hs[starts_np])

    # tolerances account for rsqrt / approx-reciprocal in the head
    assert np.allclose(np.asarray(out_mean), ref_mean, atol=3e-3, rtol=3e-3), \
        "MEAN mismatch"
    assert np.allclose(np.asarray(out_mean_split), ref_mean, atol=3e-3, rtol=3e-3), \
        "MEAN (H-split) mismatch"
    assert np.allclose(np.asarray(out_last), ref_last, atol=3e-3, rtol=3e-3), \
        "LAST mismatch"
    assert np.allclose(np.asarray(out_cls), ref_cls, atol=3e-3, rtol=3e-3), \
        "CLS mismatch"

    print("KERNEL_OK")
</pallas_src>

<mosaic_0001>
module attributes {stable_mosaic.version = 11 : i64} {
  func.func @_mean_pool_kernel(%arg0: i32, %arg1: i32, %arg2: memref<1x128xi32, #tpu.memory_space<vmem>>, %arg3: memref<128x256xf32, #tpu.memory_space<vmem>>, %arg4: memref<24x1xf32, #tpu.memory_space<vmem>>, %arg5: memref<24x256xf32, #tpu.memory_space<vmem>>) attributes {dimension_semantics = [#tpu.dimension_semantics<parallel>, #tpu.dimension_semantics<arbitrary>], iteration_bounds = array<i64: 1, 3>, scalar_prefetch = 0 : i64, scratch_operands = 0 : i64, tpu.core_type = #tpu.core_type<tc>, window_params = [{transform_indices = @transform_0, window_bounds = array<i64: 1, 128>}, {transform_indices = @transform_1, window_bounds = array<i64: 128, 256>}, {pipeline_mode = #tpu.pipeline_mode<synchronous>, transform_indices = @transform_2, window_bounds = array<i64: 24, 1>}, {transform_indices = @transform_3, window_bounds = array<i64: 24, 256>}]} {
    %c0_i32 = arith.constant 0 : i32
    %0 = arith.cmpi eq, %arg1, %c0_i32 : i32
    %1 = arith.extui %0 : i1 to i32
    %c0_i32_0 = arith.constant 0 : i32
    %2 = arith.cmpi ne, %1, %c0_i32_0 : i32
    scf.if %2 {
      %cst_10 = arith.constant 0.000000e+00 : f32
      %25 = vector.broadcast %cst_10 : f32 to vector<24x256xf32>
      %c0_11 = arith.constant 0 : index
      %c0_12 = arith.constant 0 : index
      %26 = vector.load %arg5[%c0_11, %c0_12] : memref<24x256xf32, #tpu.memory_space<vmem>>, vector<24x256xf32>
      tpu.vector_store %arg5[%c0_11, %c0_12], %25 {strides = array<i32>} : memref<24x256xf32, #tpu.memory_space<vmem>>, vector<24x256xf32>,
    } else {
    }
    %c0 = arith.constant 0 : index
    %c0_1 = arith.constant 0 : index
    %3 = vector.load %arg3[%c0, %c0_1] : memref<128x256xf32, #tpu.memory_space<vmem>>, vector<128x256xf32>
    %4 = tpu.iota {dimensions = array<i32: 0>} : vector<128x256xi32>
    %c128_i32 = arith.constant 128 : i32
    %5 = arith.muli %arg1, %c128_i32 : i32
    %6 = vector.broadcast %5 : i32 to vector<128x256xi32>
    %7 = arith.addi %4, %6 : vector<128x256xi32>
    %c312_i32 = arith.constant 312 : i32
    %8 = vector.broadcast %c312_i32 : i32 to vector<128x256xi32>
    %9 = arith.cmpi slt, %7, %8 : vector<128x256xi32>
    %cst = arith.constant 0.000000e+00 : f32
    %10 = vector.broadcast %cst : f32 to vector<128x256xf32>
    %11 = arith.select %9, %3, %10 : vector<128x256xi1>, vector<128x256xf32>
    %c0_2 = arith.constant 0 : index
    %c0_3 = arith.constant 0 : index
    %12 = vector.load %arg2[%c0_2, %c0_3] : memref<1x128xi32, #tpu.memory_space<vmem>>, vector<1x128xi32>
    %13 = tpu.iota {dimensions = array<i32: 0>} : vector<24x128xi32>
    %14 = vector.broadcast %12 : vector<1x128xi32> to vector<24x128xi32>
    %15 = arith.cmpi eq, %13, %14 : vector<24x128xi32>
    %16 = arith.extui %15 : vector<24x128xi1> to vector<24x128xi32>
    %17 = arith.sitofp %16 : vector<24x128xi32> to vector<24x128xf32>
    %c0_4 = arith.constant 0 : index
    %c0_5 = arith.constant 0 : index
    %18 = vector.load %arg5[%c0_4, %c0_5] : memref<24x256xf32, #tpu.memory_space<vmem>>, vector<24x256xf32>
    %cst_6 = arith.constant dense<0.000000e+00> : vector<24x256xf32>
    %19 = tpu.matmul %17, %11, %cst_6 {dimension_numbers = #tpu.dot_dimension_numbers<[1], [0], [0], [1], [0, 0, 1, 1], [], []>, precision = #tpu.contract_precision<fp32>} : vector<24x128xf32>, vector<128x256xf32>, vector<24x256xf32> -> vector<24x256xf32>
    %20 = arith.addf %18, %19 : vector<24x256xf32>
    %c0_7 = arith.constant 0 : index
    %c0_8 = arith.constant 0 : index
    %21 = vector.load %arg5[%c0_7, %c0_8] : memref<24x256xf32, #tpu.memory_space<vmem>>, vector<24x256xf32>
    tpu.vector_store %arg5[%c0_7, %c0_8], %20 {strides = array<i32>} : memref<24x256xf32, #tpu.memory_space<vmem>>, vector<24x256xf32>,
    %c2_i32 = arith.constant 2 : i32
    %22 = arith.cmpi eq, %arg1, %c2_i32 : i32
    %23 = arith.extui %22 : i1 to i32
    %c0_i32_9 = arith.constant 0 : i32
    %24 = arith.cmpi ne, %23, %c0_i32_9 : i32
    scf.if %24 {
      %c0_10 = arith.constant 0 : index
      %c0_11 = arith.constant 0 : index
      %25 = vector.load %arg5[%c0_10, %c0_11] : memref<24x256xf32, #tpu.memory_space<vmem>>, vector<24x256xf32>
      %c0_12 = arith.constant 0 : index
      %c0_13 = arith.constant 0 : index
      %26 = vector.load %arg4[%c0_12, %c0_13] : memref<24x1xf32, #tpu.memory_space<vmem>>, vector<24x1xf32>
      %27 = vector.broadcast %26 : vector<24x1xf32> to vector<24x256xf32>
      %28 = arith.mulf %25, %27 : vector<24x256xf32>
      %29 = arith.mulf %28, %28 : vector<24x256xf32>
      %cst_14 = arith.constant dense<0.000000e+00> : vector<24xf32>
      %30 = vector.multi_reduction <add>, %29, %cst_14 [1] : vector<24x256xf32> to vector<24xf32>
      %31 = vector.shape_cast %30 : vector<24xf32> to vector<24x1xf32>
      %cst_15 = arith.constant 1.000000e-24 : f32
      %32 = vector.broadcast %cst_15 : f32 to vector<24x1xf32>
      %33 = arith.maximumf %31, %32 : vector<24x1xf32>
      %34 = math.rsqrt %33 : vector<24x1xf32>
      %35 = vector.broadcast %34 : vector<24x1xf32> to vector<24x256xf32>
      %36 = arith.mulf %28, %35 : vector<24x256xf32>
      %c0_16 = arith.constant 0 : index
      %c0_17 = arith.constant 0 : index
      %37 = vector.load %arg5[%c0_16, %c0_17] : memref<24x256xf32, #tpu.memory_space<vmem>>, vector<24x256xf32>
      tpu.vector_store %arg5[%c0_16, %c0_17], %36 {strides = array<i32>} : memref<24x256xf32, #tpu.memory_space<vmem>>, vector<24x256xf32>,
    } else {
    }
    return
  }
  func.func @transform_0(%arg0: i32, %arg1: i32) -> (i32, i32) {
    %c0_i32 = arith.constant 0 : i32
    %c0_i32_0 = arith.constant 0 : i32
    return %c0_i32, %arg1 : i32, i32
  }
  func.func @transform_1(%arg0: i32, %arg1: i32) -> (i32, i32) {
    %c0_i32 = arith.constant 0 : i32
    return %arg1, %arg0 : i32, i32
  }
  func.func @transform_2(%arg0: i32, %arg1: i32) -> (i32, i32) {
    %c0_i32 = arith.constant 0 : i32
    %c0_i32_0 = arith.constant 0 : i32
    %c0_i32_1 = arith.constant 0 : i32
    return %c0_i32, %c0_i32_0 : i32, i32
  }
  func.func @transform_3(%arg0: i32, %arg1: i32) -> (i32, i32) {
    %c0_i32 = arith.constant 0 : i32
    %c0_i32_0 = arith.constant 0 : i32
    return %c0_i32, %arg0 : i32, i32
  }
}

</mosaic_0001>

<llo_original>
// kernel: tpu_custom_call.1
$region0: #{tpu_custom_call.1}
  #allocation0 [shape = 'u32[]', space=smem, size = 0x4, offset = 0x4, fixed_abs, tag = 'smem constant byte address 0x4 - core index']
  #allocation1 [shape = 'u32[144,128]{1,0:T(1,128)}', space=vmem, size = 0x12000, scoped, tag = 'internal scratch']
  %s0 = inlined_call_operand.vmem [shape: s32[1,384], index: 0, kind: input, shape index: {}]
  %s1 = inlined_call_operand.hbm [shape: f32[312,256], index: 1, kind: input, shape index: {}]
  %s2 = inlined_call_operand.vmem [shape: f32[24,1], index: 2, kind: input, shape index: {}]
  %s3 = inlined_call_operand.hbm [shape: f32[24,256], index: 3, kind: output, shape index: {}]
  %s4 = sld [smem:[#allocation0]]
  $region57: #{tpu_custom_call.1} parent=0
    _
  %s6 = ssub.s32 1, %s4
  %s7 = scalar_select 0, %s6, %s4
  $region1: #{tpu_custom_call.1} parent=0
    #allocation2 [shape = 'u8[262144]{0}', space=vmem, size = 0x40000, scoped, tag = 'input window, operand 1']
    #allocation3 [shape = 's32[2]{0}', space=sflag, size = 0x8, scoped, tag = 'scoped memory for tpu_custom_call.1']
    #allocation4 [shape = 's32[2]{0}', space=sflag, size = 0x8, scoped, tag = 'scoped memory for tpu_custom_call.1']
    #allocation5 [shape = 'u8[24576]{0}', space=vmem, size = 0x6000, scoped, tag = 'output window, operand 0, single buffered']
    %8 = vsyncpa [#allocation3], 0
    %s9 = scalar_lea.sflag [#allocation3], 1
    %10 = vsyncpa %s9, 0
    %11 = vsyncpa [#allocation4], 0
    loop: start=0, step=1, limit=5
    $region2: #{tpu_custom_call.1} parent=1 // loop_pre_header
      _
    $region3: #{tpu_custom_call.1} parent=1 // loop_header
      %s13 = sphi 0, %s17
      %p14 = scmp.ge.s32.totalorder %s13, 5
      %s20 = sphi 0, %s32
      %s21 = sphi 0, %s28
      %s22 = sphi 0, %s20
      %s23 = sphi 0, %s21
      %s24 = sphi 0, %s22
      %s25 = sphi 0, %s23
      %s35 = sphi 0, %s37
      %s38 = sphi 0, %s35
      %s39 = sphi 0, %s38
      %s55 = sphi 0, %s39
      %s63 = sphi 0, %s65
      %s66 = sphi 0, %s63
      %s67 = sphi 0, %s66
      %s83 = sphi 0, %s67
      %s87 = sphi 0, %s87
      %s89 = sphi 0, %s87
      %s90 = sphi 0, %s89
      %s104 = sphi 0, %s90
      %s110 = sphi 0, %s112
      %s113 = sphi 0, %s110
      %s114 = sphi 0, %s113
      %s130 = sphi 0, %s114
    $region4: #{tpu_custom_call.1} parent=1 // loop_header_branch
      %16 = sbr.rel (%p14) target = $region8
    $region5: #{tpu_custom_call.1} parent=1 // loop_body
      %s18 = ssub.s32 %s13, 1
      %s19 = ssub.s32 %s13, 2
      %s26 = sadd.s32 1, %s21
      %p27 = scmp.ge.s32.totalorder %s26, 3
      %s28 = scalar_select %p27, 0, %s26
      %s29 = sadd.s32 1, %s20
      %s30 = scalar_select %p27, %s29, %s20
      %p31 = scmp.ge.s32.totalorder %s30, 1
      %s32 = scalar_select %p31, 0, %s30
      %s33 = ssub.s32 %s21, %s28
      %p34 = scmp.eq.s32.totalorder %s33, 0
      %s36 = sadd.s32 %s35, 1
      %s37 = scalar_select %p34, %s35, %s36
      %p40 = pneg %p34
      %p41 = scmp.eq.s32.totalorder %s13, 2
      %p42 = por %p40, %p41
      %p43 = scmp.ne.s32.totalorder %s35, %s38
      %p44 = scmp.eq.s32.totalorder %s13, 0
      %p45 = por %p43, %p44
      %p46 = scmp.ne.s32.totalorder %s35, %s38
      %p47 = scmp.eq.s32.totalorder %s18, 2
      %p48 = por %p46, %p47
      %p49 = scmp.ne.s32.totalorder %s38, %s39
      %p50 = scmp.eq.s32.totalorder %s18, 0
      %p51 = por %p49, %p50
      %p52 = scmp.ne.s32.totalorder %s38, %s39
      %p53 = scmp.eq.s32.totalorder %s19, 2
      %p54 = por %p52, %p53
      %p56 = scmp.ne.s32.totalorder %s39, %s55
      %p57 = scmp.eq.s32.totalorder %s19, 0
      %p58 = por %p56, %p57
      %s59 = ssub.s32 %s21, %s28
      %s60 = ssub.s32 %s20, %s32
      %s61 = sor.u32 %s59, %s60
      %p62 = scmp.eq.s32.totalorder %s61, 0
      %s64 = sadd.s32 %s63, 1
      %s65 = scalar_select %p62, %s63, %s64
      %p68 = pneg %p62
      %p69 = scmp.eq.s32.totalorder %s13, 2
      %p70 = por %p68, %p69
      %p71 = scmp.ne.s32.totalorder %s63, %s66
      %p72 = scmp.eq.s32.totalorder %s13, 0
      %p73 = por %p71, %p72
      %p74 = scmp.ne.s32.totalorder %s63, %s66
      %p75 = scmp.eq.s32.totalorder %s18, 2
      %p76 = por %p74, %p75
      %p77 = scmp.ne.s32.totalorder %s66, %s67
      %p78 = scmp.eq.s32.totalorder %s18, 0
      %p79 = por %p77, %p78
      %p80 = scmp.ne.s32.totalorder %s66, %s67
      %p81 = scmp.eq.s32.totalorder %s19, 2
      %p82 = por %p80, %p81
      %p84 = scmp.ne.s32.totalorder %s67, %s83
      %p85 = scmp.eq.s32.totalorder %s19, 0
      %p86 = por %p84, %p85
      %s88 = sadd.s32 %s87, 1
      %p91 = scmp.eq.s32.totalorder %s13, 2
      %p92 = scmp.ne.s32.totalorder %s87, %s89
      %p93 = scmp.eq.s32.totalorder %s13, 0
      %p94 = por %p92, %p93
      %p95 = scmp.ne.s32.totalorder %s87, %s89
      %p96 = scmp.eq.s32.totalorder %s18, 2
      %p97 = por %p95, %p96
      %p98 = scmp.ne.s32.totalorder %s89, %s90
      %p99 = scmp.eq.s32.totalorder %s18, 0
      %p100 = por %p98, %p99
      %p101 = scmp.ne.s32.totalorder %s89, %s90
      %p102 = scmp.eq.s32.totalorder %s19, 2
      %p103 = por %p101, %p102
      %p105 = scmp.ne.s32.totalorder %s90, %s104
      %p106 = scmp.eq.s32.totalorder %s19, 0
      %p107 = por %p105, %p106
      %s108 = ssub.s32 %s20, %s32
      %p109 = scmp.eq.s32.totalorder %s108, 0
      %s111 = sadd.s32 %s110, 1
      %s112 = scalar_select %p109, %s110, %s111
      %p115 = pneg %p109
      %p116 = scmp.eq.s32.totalorder %s13, 2
      %p117 = por %p115, %p116
      %p118 = scmp.ne.s32.totalorder %s110, %s113
      %p119 = scmp.eq.s32.totalorder %s13, 0
      %p120 = por %p118, %p119
      %p121 = scmp.ne.s32.totalorder %s110, %s113
      %p122 = scmp.eq.s32.totalorder %s18, 2
      %p123 = por %p121, %p122
      %p124 = scmp.ne.s32.totalorder %s113, %s114
      %p125 = scmp.eq.s32.totalorder %s18, 0
      %p126 = por %p124, %p125
      %p127 = scmp.ne.s32.totalorder %s113, %s114
      %p128 = scmp.eq.s32.totalorder %s19, 2
      %p129 = por %p127, %p128
      %p131 = scmp.ne.s32.totalorder %s114, %s130
      %p132 = scmp.eq.s32.totalorder %s19, 0
      %p133 = por %p131, %p132
      %p134 = scmp.le.s32.totalorder 1, %s13
      %p135 = scmp.lt.s32.totalorder %s13, 4
      %p136 = pnand %p134, %p135
      %p137 = pneg %p136
      // Predicated region
      $region9: #{tpu_custom_call.1} parent=5 // pred_check
        _
      $region10: #{tpu_custom_call.1} parent=5 // pred_check_branch
        %139 = sbr.rel (%p136) target = $region12
      $region11: #{tpu_custom_call.1} parent=5 // pred_region
        %s140 = ssub.s32 %s13, 1
        // Predicated region
        $region13: #{tpu_custom_call.1} parent=11 // pred_check
          %p141 = pneg %p100
        $region14: #{tpu_custom_call.1} parent=11 // pred_check_branch
          %143 = sbr.rel (%p141) target = $region16
        $region15: #{tpu_custom_call.1} parent=11 // pred_region
          _
        $region16: #{tpu_custom_call.1} parent=11 // pred_fallthru
          _
      $region12: #{tpu_custom_call.1} parent=5 // pred_fallthru
        _
      %p144 = scmp.lt.s32.totalorder %s13, 3
      // Predicated region
      $region17: #{tpu_custom_call.1} parent=5 // pred_check
        %p145 = pneg %p144
      $region18: #{tpu_custom_call.1} parent=5 // pred_check_branch
        %147 = sbr.rel (%p145) target = $region20
      $region19: #{tpu_custom_call.1} parent=5 // pred_region
        // Predicated region
        $region21: #{tpu_custom_call.1} parent=19 // pred_check
          %p148 = pneg %p45
        $region22: #{tpu_custom_call.1} parent=19 // pred_check_branch
          %150 = sbr.rel (%p148) target = $region24
        $region23: #{tpu_custom_call.1} parent=19 // pred_region
          %p151 = scmp.lt.s32.totalorder %s21, 2
          %s152 = scalar_select %p151, %s21, 2
          %s153 = scalar_lea.vmem %s0, %s152
        $region24: #{tpu_custom_call.1} parent=19 // pred_fallthru
          _
        // Predicated region
        $region25: #{tpu_custom_call.1} parent=19 // pred_check
          %p154 = pneg %p73
        $region26: #{tpu_custom_call.1} parent=19 // pred_check_branch
          %156 = sbr.rel (%p154) target = $region28
        $region27: #{tpu_custom_call.1} parent=19 // pred_region
          %s157 = sand.u32 %s63, 1
          %s158 = scalar_lea.sflag [#allocation3], %s157
          %s159 = sand.u32 %s63, 1
          %s160 = smul.addr %s159, 256
          %s161 = scalar_lea.vmem [#allocation2], %s160
          %s162 = smul.u32 16, %s21
          %s163 = smul.u32 2, %s20
          %s164 = ssub.s32 39, %s162
          %p165 = scmp.lt.s32.totalorder %s164, 16
          %s166 = scalar_select %p165, %s164, 16
          %s167 = smul.u32 128, %s166
          %s168 = smul.u32 %s167, 2
          %s170 = ssub.s32 4096, %s168
          %171 = vsyncadd %s158, %s170
          %p172 = scmp.ne.s32.totalorder 0, %s168
          %s173 = smul.addr %s162, 2
          %s174 = sadd.s32 %s163, %s173
          %s175 = smul.addr %s174, 128
          %s176 = scalar_lea.hbm %s1, %s175
          %s177 = smul.u32 16, %s166
          %s178 = sshll.u32 %s161, 4
          %s179 = int_to_ptr.vmem [resolvable:$true] %s178
          %s180 = sshll.u32 %s177, 4
          %184 = dma.hbm_to_vmem [thread:$0]  (%p172), %s176, %s180, %s179, %s158, 256, 256, 16
        $region28: #{tpu_custom_call.1} parent=19 // pred_fallthru
          _
      $region20: #{tpu_custom_call.1} parent=5 // pred_fallthru
        _
      %p185 = scmp.le.s32.totalorder 1, %s13
      %p186 = scmp.lt.s32.totalorder %s13, 4
      %p187 = pnand %p185, %p186
      %p188 = pneg %p187
      // Predicated region
      $region29: #{tpu_custom_call.1} parent=5 // pred_check
        _
      $region30: #{tpu_custom_call.1} parent=5 // pred_check_branch
        %190 = sbr.rel (%p187) target = $region32
      $region31: #{tpu_custom_call.1} parent=5 // pred_region
        %s191 = ssub.s32 %s13, 1
        %s192 = sand.u32 %s66, 1
        %s193 = scalar_lea.sflag [#allocation3], %s192
        %s194 = sand.u32 %s66, 1
        %s195 = smul.addr %s194, 256
        %s196 = scalar_lea.vmem [#allocation2], %s195
        // Predicated region
        $region33: #{tpu_custom_call.1} parent=31 // pred_check
          %p197 = pneg %p79
        $region34: #{tpu_custom_call.1} parent=31 // pred_check_branch
          %199 = sbr.rel (%p197) target = $region36
        $region35: #{tpu_custom_call.1} parent=31 // pred_region
          %200 = dma.done %s193, 4096
        $region36: #{tpu_custom_call.1} parent=31 // pred_fallthru
          _
        %p201 = scmp.lt.s32.totalorder %s23, 2
        %s202 = scalar_select %p201, %s23, 2
        %s203 = scalar_lea.vmem %s0, %s202
        %p204 = pneg %p51
        %p205 = pneg %p48
        %s206 = sand.u32 %s66, 1
        %s207 = scalar_lea.sflag [#allocation3], %s206
        %s208 = sand.u32 %s66, 1
        %s209 = smul.addr %s208, 256
        %s210 = scalar_lea.vmem [#allocation2], %s209
        %p211 = pneg %p79
        %p212 = pneg %p76
        %p213 = pneg %p100
        %p214 = pneg %p97
        %p215 = pneg %p126
        %p216 = pneg %p123
        %p217 = scmp.lt.s32.totalorder %s23, 2
        %s218 = scalar_select %p217, %s23, 2
        %s219 = scalar_lea.vmem %s0, %s218
        %s220 = smul.u32 16, %s23
        %s221 = smul.u32 2, %s22
        %s222 = ssub.s32 39, %s220
        %p223 = scmp.lt.s32.totalorder %s222, 16
        %s224 = scalar_select %p223, %s222, 16
        %s225 = smul.u32 128, %s224
        %s226 = smul.u32 %s225, 2
        %s227 = smul.u32 2, %s22
        %p228 = scmp.eq.s32.totalorder %s23, 0
        // Predicated region
        $region37: #{tpu_custom_call.1} parent=31 // pred_check
          %p229 = pneg %p228
        $region38: #{tpu_custom_call.1} parent=31 // pred_check_branch
          %231 = sbr.rel (%p229) target = $region40
        $region39: #{tpu_custom_call.1} parent=31 // pred_region
          %232 = vst [vmem:[#allocation5] sm:$0xff] 0.0
          %233 = vst [vmem:[#allocation5 + $0x8] sm:$0xff] 0.0
          %234 = vst [vmem:[#allocation5 + $0x10] sm:$0xff] 0.0
          %235 = vst [vmem:[#allocation5 + $0x18] sm:$0xff] 0.0
          %236 = vst [vmem:[#allocation5 + $0x20] sm:$0xff] 0.0
          %237 = vst [vmem:[#allocation5 + $0x28] sm:$0xff] 0.0
        $region40: #{tpu_custom_call.1} parent=31 // pred_fallthru
          _
        %v238 = vld [vmem:[%s196] sm:$0xff]
        %v239 = vld [vmem:[%s196 + $0x8] sm:$0xff]
        %v240 = vld [vmem:[%s196 + $0x10] sm:$0xff]
        %v241 = vld [vmem:[%s196 + $0x18] sm:$0xff]
        %v242 = vld [vmem:[%s196 + $0x20] sm:$0xff]
        %v243 = vld [vmem:[%s196 + $0x28] sm:$0xff]
        %v244 = vld [vmem:[%s196 + $0x30] sm:$0xff]
        %v245 = vld [vmem:[%s196 + $0x38] sm:$0xff]
        %v246 = vld [vmem:[%s196 + $0x40] sm:$0xff]
        %v247 = vld [vmem:[%s196 + $0x48] sm:$0xff]
        %v248 = vld [vmem:[%s196 + $0x50] sm:$0xff]
        %v249 = vld [vmem:[%s196 + $0x58] sm:$0xff]
        %v250 = vld [vmem:[%s196 + $0x60] sm:$0xff]
        %v251 = vld [vmem:[%s196 + $0x68] sm:$0xff]
        %v252 = vld [vmem:[%s196 + $0x70] sm:$0xff]
        %v253 = vld [vmem:[%s196 + $0x78] sm:$0xff]
        %v254 = vld [vmem:[%s196 + $0x80] sm:$0xff]
        %v255 = vld [vmem:[%s196 + $0x88] sm:$0xff]
        %v256 = vld [vmem:[%s196 + $0x90] sm:$0xff]
        %v257 = vld [vmem:[%s196 + $0x98] sm:$0xff]
        %v258 = vld [vmem:[%s196 + $0xa0] sm:$0xff]
        %v259 = vld [vmem:[%s196 + $0xa8] sm:$0xff]
        %v260 = vld [vmem:[%s196 + $0xb0] sm:$0xff]
        %v261 = vld [vmem:[%s196 + $0xb8] sm:$0xff]
        %v262 = vld [vmem:[%s196 + $0xc0] sm:$0xff]
        %v263 = vld [vmem:[%s196 + $0xc8] sm:$0xff]
        %v264 = vld [vmem:[%s196 + $0xd0] sm:$0xff]
        %v265 = vld [vmem:[%s196 + $0xd8] sm:$0xff]
        %v266 = vld [vmem:[%s196 + $0xe0] sm:$0xff]
        %v267 = vld [vmem:[%s196 + $0xe8] sm:$0xff]
        %v268 = vld [vmem:[%s196 + $0xf0] sm:$0xff]
        %v269 = vld [vmem:[%s196 + $0xf8] sm:$0xff]
        %v270 = vlaneseq
        %v271 = vshrl.u32 %v270, 7
        %v272 = vadd.s32 %v271, 8
        %v273 = vadd.s32 %v271, 16
        %v274 = vadd.s32 %v271, 24
        %v275 = vadd.s32 %v271, 32
        %v276 = vadd.s32 %v271, 40
        %v277 = vadd.s32 %v271, 48
        %v278 = vadd.s32 %v271, 56
        %v279 = vadd.s32 %v271, 64
        %v280 = vadd.s32 %v271, 72
        %v281 = vadd.s32 %v271, 80
        %v282 = vadd.s32 %v271, 88
        %v283 = vadd.s32 %v271, 96
        %v284 = vadd.s32 %v271, 104
        %v285 = vadd.s32 %v271, 112
        %v286 = vadd.s32 %v271, 120
        %s287 = smul.u32 %s23, 128
        %v288 = vstv %s287
        %v289 = vadd.s32 %v271, %v288
        %v290 = vadd.s32 %v272, %v288
        %v291 = vadd.s32 %v273, %v288
        %v292 = vadd.s32 %v274, %v288
        %v293 = vadd.s32 %v275, %v288
        %v294 = vadd.s32 %v276, %v288
        %v295 = vadd.s32 %v277, %v288
        %v296 = vadd.s32 %v278, %v288
        %v297 = vadd.s32 %v279, %v288
        %v298 = vadd.s32 %v280, %v288
        %v299 = vadd.s32 %v281, %v288
        %v300 = vadd.s32 %v282, %v288
        %v301 = vadd.s32 %v283, %v288
        %v302 = vadd.s32 %v284, %v288
        %v303 = vadd.s32 %v285, %v288
        %v304 = vadd.s32 %v286, %v288
        %vm305 = vcmp.lt.s32.totalorder %v289, 312
        %vm306 = vcmp.lt.s32.totalorder %v290, 312
        %vm307 = vcmp.lt.s32.totalorder %v291, 312
        %vm308 = vcmp.lt.s32.totalorder %v292, 312
        %vm309 = vcmp.lt.s32.totalorder %v293, 312
        %vm310 = vcmp.lt.s32.totalorder %v294, 312
        %vm311 = vcmp.lt.s32.totalorder %v295, 312
        %vm312 = vcmp.lt.s32.totalorder %v296, 312
        %vm313 = vcmp.lt.s32.totalorder %v297, 312
        %vm314 = vcmp.lt.s32.totalorder %v298, 312
        %vm315 = vcmp.lt.s32.totalorder %v299, 312
        %vm316 = vcmp.lt.s32.totalorder %v300, 312
        %vm317 = vcmp.lt.s32.totalorder %v301, 312
        %vm318 = vcmp.lt.s32.totalorder %v302, 312
        %vm319 = vcmp.lt.s32.totalorder %v303, 312
        %vm320 = vcmp.lt.s32.totalorder %v304, 312
        %v321 = vsel %vm305, %v238, 0.0
        %v322 = vsel %vm305, %v239, 0.0
        %v323 = vsel %vm306, %v240, 0.0
        %v324 = vsel %vm306, %v241, 0.0
        %v325 = vsel %vm307, %v242, 0.0
        %v326 = vsel %vm307, %v243, 0.0
        %v327 = vsel %vm308, %v244, 0.0
        %v328 = vsel %vm308, %v245, 0.0
        %v329 = vsel %vm309, %v246, 0.0
        %v330 = vsel %vm309, %v247, 0.0
        %v331 = vsel %vm310, %v248, 0.0
        %v332 = vsel %vm310, %v249, 0.0
        %v333 = vsel %vm311, %v250, 0.0
        %v334 = vsel %vm311, %v251, 0.0
        %v335 = vsel %vm312, %v252, 0.0
        %v336 = vsel %vm312, %v253, 0.0
        %v337 = vsel %vm313, %v254, 0.0
        %v338 = vsel %vm313, %v255, 0.0
        %v339 = vsel %vm314, %v256, 0.0
        %v340 = vsel %vm314, %v257, 0.0
        %v341 = vsel %vm315, %v258, 0.0
        %v342 = vsel %vm315, %v259, 0.0
        %v343 = vsel %vm316, %v260, 0.0
        %v344 = vsel %vm316, %v261, 0.0
        %v345 = vsel %vm317, %v262, 0.0
        %v346 = vsel %vm317, %v263, 0.0
        %v347 = vsel %vm318, %v264, 0.0
        %v348 = vsel %vm318, %v265, 0.0
        %v349 = vsel %vm319, %v266, 0.0
        %v350 = vsel %vm319, %v267, 0.0
        %v351 = vsel %vm320, %v268, 0.0
        %v352 = vsel %vm320, %v269, 0.0
        %v353 = vld [vmem:[%s219] sm:$0x1]
        %v354 = vlaneseq
        %v355 = vshrl.u32 %v354, 7
        %v356 = vsub.s32 0, %v355
        %v357 = vrot.slane %v353, %v356
        %vm358 = vcmp.eq.s32.totalorder %v271, %v357
        %vm359 = vcmp.eq.s32.totalorder %v272, %v357
        %vm360 = vcmp.eq.s32.totalorder %v273, %v357
        %v361 = vsel %vm358, 1, 0
        %v362 = vsel %vm359, 1, 0
        %v363 = vsel %vm360, 1, 0
        %v364 = vcvt.s32.f32 %v361
        %v365 = vcvt.s32.f32 %v362
        %v366 = vcvt.s32.f32 %v363
        %v367 = vld [vmem:[#allocation5] sm:$0xff]
        %v368 = vld [vmem:[#allocation5 + $0x8] sm:$0xff]
        %v369 = vld [vmem:[#allocation5 + $0x10] sm:$0xff]
        %v370 = vld [vmem:[#allocation5 + $0x18] sm:$0xff]
        %v371 = vld [vmem:[#allocation5 + $0x20] sm:$0xff]
        %v372 = vld [vmem:[#allocation5 + $0x28] sm:$0xff]
        %v373 = vand.u32 %v322, 4294901760
        %374 = vmatprep.subr.mxu0 %v373
        %v375 = vand.u32 %v321, 4294901760
        %376 = vmatpush1.msra.mxu0 %v375
        %v377 = vand.u32 %v324, 4294901760
        %378 = vmatprep.subr.mxu0 %v377
        %v379 = vand.u32 %v323, 4294901760
        %380 = vmatpush1.msra.mxu0 %v379
        %v381 = vand.u32 %v326, 4294901760
        %382 = vmatprep.subr.mxu0 %v381
        %v383 = vand.u32 %v325, 4294901760
        %384 = vmatpush1.msra.mxu0 %v383
        %v385 = vand.u32 %v328, 4294901760
        %386 = vmatprep.subr.mxu0 %v385
        %v387 = vand.u32 %v327, 4294901760
        %388 = vmatpush1.msra.mxu0 %v387
        %v389 = vand.u32 %v330, 4294901760
        %390 = vmatprep.subr.mxu0 %v389
        %v391 = vand.u32 %v329, 4294901760
        %392 = vmatpush1.msra.mxu0 %v391
        %v393 = vand.u32 %v332, 4294901760
        %394 = vmatprep.subr.mxu0 %v393
        %v395 = vand.u32 %v331, 4294901760
        %396 = vmatpush1.msra.mxu0 %v395
        %v397 = vand.u32 %v334, 4294901760
        %398 = vmatprep.subr.mxu0 %v397
        %v399 = vand.u32 %v333, 4294901760
        %400 = vmatpush1.msra.mxu0 %v399
        %v401 = vand.u32 %v336, 4294901760
        %402 = vmatprep.subr.mxu0 %v401
        %v403 = vand.u32 %v335, 4294901760
        %404 = vmatpush1.msra.mxu0 %v403
        %v405 = vand.u32 %v338, 4294901760
        %406 = vmatprep.subr.mxu0 %v405
        %v407 = vand.u32 %v337, 4294901760
        %408 = vmatpush1.msra.mxu0 %v407
        %v409 = vand.u32 %v340, 4294901760
        %410 = vmatprep.subr.mxu0 %v409
        %v411 = vand.u32 %v339, 4294901760
        %412 = vmatpush1.msra.mxu0 %v411
        %v413 = vand.u32 %v342, 4294901760
        %414 = vmatprep.subr.mxu0 %v413
        %v415 = vand.u32 %v341, 4294901760
        %416 = vmatpush1.msra.mxu0 %v415
        %v417 = vand.u32 %v344, 4294901760
        %418 = vmatprep.subr.mxu0 %v417
        %v419 = vand.u32 %v343, 4294901760
        %420 = vmatpush1.msra.mxu0 %v419
        %v421 = vand.u32 %v346, 4294901760
        %422 = vmatprep.subr.mxu0 %v421
        %v423 = vand.u32 %v345, 4294901760
        %424 = vmatpush1.msra.mxu0 %v423
        %v425 = vand.u32 %v348, 4294901760
        %426 = vmatprep.subr.mxu0 %v425
        %v427 = vand.u32 %v347, 4294901760
        %428 = vmatpush1.msra.mxu0 %v427
        %v429 = vand.u32 %v350, 4294901760
        %430 = vmatprep.subr.mxu0 %v429
        %v431 = vand.u32 %v349, 4294901760
        %432 = vmatpush1.msra.mxu0 %v431
        %v433 = vand.u32 %v352, 4294901760
        %434 = vmatprep.subr.mxu0 %v433
        %v435 = vand.u32 %v351, 4294901760
        %436 = vmatpush1.msra.mxu0 %v435
        %437 = vmatprep.subr.mxu0 0.0
        %438 = vmatpush1.msra.mxu0 0.0
        %439 = vmatprep.subr.mxu0 0.0
        %440 = vmatpush1.msra.mxu0 0.0
        %441 = vmatprep.subr.mxu0 0.0
        %442 = vmatpush1.msra.mxu0 0.0
        %443 = vmatprep.subr.mxu0 0.0
        %444 = vmatpush1.msra.mxu0 0.0
        %445 = vmatprep.subr.mxu0 0.0
        %446 = vmatpush1.msra.mxu0 0.0
        %447 = vmatprep.subr.mxu0 0.0
        %448 = vmatpush1.msra.mxu0 0.0
        %449 = vmatprep.subr.mxu0 0.0
        %450 = vmatpush1.msra.mxu0 0.0
        %451 = vmatprep.subr.mxu0 0.0
        %452 = vmatpush1.msra.mxu0 0.0
        %453 = vmatprep.subr.mxu0 0.0
        %454 = vmatpush1.msra.mxu0 0.0
        %455 = vmatprep.subr.mxu0 0.0
        %456 = vmatpush1.msra.mxu0 0.0
        %457 = vmatprep.subr.mxu0 0.0
        %458 = vmatpush1.msra.mxu0 0.0
        %459 = vmatprep.subr.mxu0 0.0
        %460 = vmatpush1.msra.mxu0 0.0
        %461 = vmatprep.subr.mxu0 0.0
        %462 = vmatpush1.msra.mxu0 0.0
        %463 = vmatprep.subr.mxu0 0.0
        %464 = vmatpush1.msra.mxu0 0.0
        %465 = vmatprep.subr.mxu0 0.0
        %466 = vmatpush1.msra.mxu0 0.0
        %467 = vmatprep.subr.mxu0 0.0
        %468 = vmatpush1.msra.mxu0 0.0
        %469 = vmatprep.mubr.f32.mxu0 0.0
        %v470 = vand.u32 %v364, 4294901760
        %v471 = vsub.f32 %v364, %v470
        %v472 = vand.u32 %v471, 4294901760
        %v473 = vsub.f32 %v471, %v472
        %v474 = vand.u32 %v473, 4294901760
        %475 = vmatmul.mubr.f32.gmra.mrb[0].mxu0 %v474
        %v476 = vpop.f32.mrb[0].mxu0
        %v477 = vadd.f32 0.0, %v476
        %v478 = vpop.f32.mrb[0].mxu0
        %v479 = vadd.f32 0.0, %v478
        %480 = vmatprep.mubr.f32.mxu0 0.0
        %v481 = vand.u32 %v365, 4294901760
        %v482 = vsub.f32 %v365, %v481
        %v483 = vand.u32 %v482, 4294901760
        %v484 = vsub.f32 %v482, %v483
        %v485 = vand.u32 %v484, 4294901760
        %486 = vmatmul.mubr.f32.gmra.mrb[0].mxu0 %v485
        %v487 = vpop.f32.mrb[0].mxu0
        %v488 = vadd.f32 0.0, %v487
        %v489 = vpop.f32.mrb[0].mxu0
        %v490 = vadd.f32 0.0, %v489
        %491 = vmatprep.mubr.f32.mxu0 0.0
        %v492 = vand.u32 %v366, 4294901760
        %v493 = vsub.f32 %v366, %v492
        %v494 = vand.u32 %v493, 4294901760
        %v495 = vsub.f32 %v493, %v494
        %v496 = vand.u32 %v495, 4294901760
        %497 = vmatmul.mubr.f32.gmra.mrb[0].mxu0 %v496
        %v498 = vpop.f32.mrb[0].mxu0
        %v499 = vadd.f32 0.0, %v498
        %v500 = vpop.f32.mrb[0].mxu0
        %v501 = vadd.f32 0.0, %v500
        %502 = vdwg.mxu0
        %v503 = vand.u32 %v322, 4294901760
        %v504 = vsub.f32 %v322, %v503
        %v505 = vand.u32 %v504, 4294901760
        %v506 = vsub.f32 %v504, %v505
        %v507 = vand.u32 %v506, 4294901760
        %508 = vmatprep.subr.mxu0 %v507
        %v509 = vand.u32 %v321, 4294901760
        %v510 = vsub.f32 %v321, %v509
        %v511 = vand.u32 %v510, 4294901760
        %v512 = vsub.f32 %v510, %v511
        %v513 = vand.u32 %v512, 4294901760
        %514 = vmatpush1.msra.mxu0 %v513
        %v515 = vand.u32 %v324, 4294901760
        %v516 = vsub.f32 %v324, %v515
        %v517 = vand.u32 %v516, 4294901760
        %v518 = vsub.f32 %v516, %v517
        %v519 = vand.u32 %v518, 4294901760
        %520 = vmatprep.subr.mxu0 %v519
        %v521 = vand.u32 %v323, 4294901760
        %v522 = vsub.f32 %v323, %v521
        %v523 = vand.u32 %v522, 4294901760
        %v524 = vsub.f32 %v522, %v523
        %v525 = vand.u32 %v524, 4294901760
        %526 = vmatpush1.msra.mxu0 %v525
        %v527 = vand.u32 %v326, 4294901760
        %v528 = vsub.f32 %v326, %v527
        %v529 = vand.u32 %v528, 4294901760
        %v530 = vsub.f32 %v528, %v529
        %v531 = vand.u32 %v530, 4294901760
        %532 = vmatprep.subr.mxu0 %v531
        %v533 = vand.u32 %v325, 4294901760
        %v534 = vsub.f32 %v325, %v533
        %v535 = vand.u32 %v534, 4294901760
        %v536 = vsub.f32 %v534, %v535
        %v537 = vand.u32 %v536, 4294901760
        %538 = vmatpush1.msra.mxu0 %v537
        %v539 = vand.u32 %v328, 4294901760
        %v540 = vsub.f32 %v328, %v539
        %v541 = vand.u32 %v540, 4294901760
        %v542 = vsub.f32 %v540, %v541
        %v543 = vand.u32 %v542, 4294901760
        %544 = vmatprep.subr.mxu0 %v543
        %v545 = vand.u32 %v327, 4294901760
        %v546 = vsub.f32 %v327, %v545
        %v547 = vand.u32 %v546, 4294901760
        %v548 = vsub.f32 %v546, %v547
        %v549 = vand.u32 %v548, 4294901760
        %550 = vmatpush1.msra.mxu0 %v549
        %v551 = vand.u32 %v330, 4294901760
        %v552 = vsub.f32 %v330, %v551
        %v553 = vand.u32 %v552, 4294901760
        %v554 = vsub.f32 %v552, %v553
        %v555 = vand.u32 %v554, 4294901760
        %556 = vmatprep.subr.mxu0 %v555
        %v557 = vand.u32 %v329, 4294901760
        %v558 = vsub.f32 %v329, %v557
        %v559 = vand.u32 %v558, 4294901760
        %v560 = vsub.f32 %v558, %v559
        %v561 = vand.u32 %v560, 4294901760
        %562 = vmatpush1.msra.mxu0 %v561
        %v563 = vand.u32 %v332, 4294901760
        %v564 = vsub.f32 %v332, %v563
        %v565 = vand.u32 %v564, 4294901760
        %v566 = vsub.f32 %v564, %v565
        %v567 = vand.u32 %v566, 4294901760
        %568 = vmatprep.subr.mxu0 %v567
        %v569 = vand.u32 %v331, 4294901760
        %v570 = vsub.f32 %v331, %v569
        %v571 = vand.u32 %v570, 4294901760
        %v572 = vsub.f32 %v570, %v571
        %v573 = vand.u32 %v572, 4294901760
        %574 = vmatpush1.msra.mxu0 %v573
        %v575 = vand.u32 %v334, 4294901760
        %v576 = vsub.f32 %v334, %v575
        %v577 = vand.u32 %v576, 4294901760
        %v578 = vsub.f32 %v576, %v577
        %v579 = vand.u32 %v578, 4294901760
        %580 = vmatprep.subr.mxu0 %v579
        %v581 = vand.u32 %v333, 4294901760
        %v582 = vsub.f32 %v333, %v581
        %v583 = vand.u32 %v582, 4294901760
        %v584 = vsub.f32 %v582, %v583
        %v585 = vand.u32 %v584, 4294901760
        %586 = vmatpush1.msra.mxu0 %v585
        %v587 = vand.u32 %v336, 4294901760
        %v588 = vsub.f32 %v336, %v587
        %v589 = vand.u32 %v588, 4294901760
        %v590 = vsub.f32 %v588, %v589
        %v591 = vand.u32 %v590, 4294901760
        %592 = vmatprep.subr.mxu0 %v591
        %v593 = vand.u32 %v335, 4294901760
        %v594 = vsub.f32 %v335, %v593
        %v595 = vand.u32 %v594, 4294901760
        %v596 = vsub.f32 %v594, %v595
        %v597 = vand.u32 %v596, 4294901760
        %598 = vmatpush1.msra.mxu0 %v597
        %v599 = vand.u32 %v338, 4294901760
        %v600 = vsub.f32 %v338, %v599
        %v601 = vand.u32 %v600, 4294901760
        %v602 = vsub.f32 %v600, %v601
        %v603 = vand.u32 %v602, 4294901760
        %604 = vmatprep.subr.mxu0 %v603
        %v605 = vand.u32 %v337, 4294901760
        %v606 = vsub.f32 %v337, %v605
        %v607 = vand.u32 %v606, 4294901760
        %v608 = vsub.f32 %v606, %v607
        %v609 = vand.u32 %v608, 4294901760
        %610 = vmatpush1.msra.mxu0 %v609
        %v611 = vand.u32 %v340, 4294901760
        %v612 = vsub.f32 %v340, %v611
        %v613 = vand.u32 %v612, 4294901760
        %v614 = vsub.f32 %v612, %v613
        %v615 = vand.u32 %v614, 4294901760
        %616 = vmatprep.subr.mxu0 %v615
        %v617 = vand.u32 %v339, 4294901760
        %v618 = vsub.f32 %v339, %v617
        %v619 = vand.u32 %v618, 4294901760
        %v620 = vsub.f32 %v618, %v619
        %v621 = vand.u32 %v620, 4294901760
        %622 = vmatpush1.msra.mxu0 %v621
        %v623 = vand.u32 %v342, 4294901760
        %v624 = vsub.f32 %v342, %v623
        %v625 = vand.u32 %v624, 4294901760
        %v626 = vsub.f32 %v624, %v625
        %v627 = vand.u32 %v626, 4294901760
        %628 = vmatprep.subr.mxu0 %v627
        %v629 = vand.u32 %v341, 4294901760
        %v630 = vsub.f32 %v341, %v629
        %v631 = vand.u32 %v630, 4294901760
        %v632 = vsub.f32 %v630, %v631
        %v633 = vand.u32 %v632, 4294901760
        %634 = vmatpush1.msra.mxu0 %v633
        %v635 = vand.u32 %v344, 4294901760
        %v636 = vsub.f32 %v344, %v635
        %v637 = vand.u32 %v636, 4294901760
        %v638 = vsub.f32 %v636, %v637
        %v639 = vand.u32 %v638, 4294901760
        %640 = vmatprep.subr.mxu0 %v639
        %v641 = vand.u32 %v343, 4294901760
        %v642 = vsub.f32 %v343, %v641
        %v643 = vand.u32 %v642, 4294901760
        %v644 = vsub.f32 %v642, %v643
        %v645 = vand.u32 %v644, 4294901760
        %646 = vmatpush1.msra.mxu0 %v645
        %v647 = vand.u32 %v346, 4294901760
        %v648 = vsub.f32 %v346, %v647
        %v649 = vand.u32 %v648, 4294901760
        %v650 = vsub.f32 %v648, %v649
        %v651 = vand.u32 %v650, 4294901760
        %652 = vmatprep.subr.mxu0 %v651
        %v653 = vand.u32 %v345, 4294901760
        %v654 = vsub.f32 %v345, %v653
        %v655 = vand.u32 %v654, 4294901760
        %v656 = vsub.f32 %v654, %v655
        %v657 = vand.u32 %v656, 4294901760
        %658 = vmatpush1.msra.mxu0 %v657
        %v659 = vand.u32 %v348, 4294901760
        %v660 = vsub.f32 %v348, %v659
        %v661 = vand.u32 %v660, 4294901760
        %v662 = vsub.f32 %v660, %v661
        %v663 = vand.u32 %v662, 4294901760
        %664 = vmatprep.subr.mxu0 %v663
        %v665 = vand.u32 %v347, 4294901760
        %v666 = vsub.f32 %v347, %v665
        %v667 = vand.u32 %v666, 4294901760
        %v668 = vsub.f32 %v666, %v667
        %v669 = vand.u32 %v668, 4294901760
        %670 = vmatpush1.msra.mxu0 %v669
        %v671 = vand.u32 %v350, 4294901760
        %v672 = vsub.f32 %v350, %v671
        %v673 = vand.u32 %v672, 4294901760
        %v674 = vsub.f32 %v672, %v673
        %v675 = vand.u32 %v674, 4294901760
        %676 = vmatprep.subr.mxu0 %v675
        %v677 = vand.u32 %v349, 4294901760
        %v678 = vsub.f32 %v349, %v677
        %v679 = vand.u32 %v678, 4294901760
        %v680 = vsub.f32 %v678, %v679
        %v681 = vand.u32 %v680, 4294901760
        %682 = vmatpush1.msra.mxu0 %v681
        %v683 = vand.u32 %v352, 4294901760
        %v684 = vsub.f32 %v352, %v683
        %v685 = vand.u32 %v684, 4294901760
        %v686 = vsub.f32 %v684, %v685
        %v687 = vand.u32 %v686, 4294901760
        %688 = vmatprep.subr.mxu0 %v687
        %v689 = vand.u32 %v351, 4294901760
        %v690 = vsub.f32 %v351, %v689
        %v691 = vand.u32 %v690, 4294901760
        %v692 = vsub.f32 %v690, %v691
        %v693 = vand.u32 %v692, 4294901760
        %694 = vmatpush1.msra.mxu0 %v693
        %695 = vmatprep.subr.mxu0 0.0
        %696 = vmatpush1.msra.mxu0 0.0
        %697 = vmatprep.subr.mxu0 0.0
        %698 = vmatpush1.msra.mxu0 0.0
        %699 = vmatprep.subr.mxu0 0.0
        %700 = vmatpush1.msra.mxu0 0.0
        %701 = vmatprep.subr.mxu0 0.0
        %702 = vmatpush1.msra.mxu0 0.0
        %703 = vmatprep.subr.mxu0 0.0
        %704 = vmatpush1.msra.mxu0 0.0
        %705 = vmatprep.subr.mxu0 0.0
        %706 = vmatpush1.msra.mxu0 0.0
        %707 = vmatprep.subr.mxu0 0.0
        %708 = vmatpush1.msra.mxu0 0.0
        %709 = vmatprep.subr.mxu0 0.0
        %710 = vmatpush1.msra.mxu0 0.0
        %711 = vmatprep.subr.mxu0 0.0
        %712 = vmatpush1.msra.mxu0 0.0
        %713 = vmatprep.subr.mxu0 0.0
        %714 = vmatpush1.msra.mxu0 0.0
        %715 = vmatprep.subr.mxu0 0.0
        %716 = vmatpush1.msra.mxu0 0.0
        %717 = vmatprep.subr.mxu0 0.0
        %718 = vmatpush1.msra.mxu0 0.0
        %719 = vmatprep.subr.mxu0 0.0
        %720 = vmatpush1.msra.mxu0 0.0
        %721 = vmatprep.subr.mxu0 0.0
        %722 = vmatpush1.msra.mxu0 0.0
        %723 = vmatprep.subr.mxu0 0.0
        %724 = vmatpush1.msra.mxu0 0.0
        %725 = vmatprep.subr.mxu0 0.0
        %726 = vmatpush1.msra.mxu0 0.0
        %727 = vmatprep.mubr.f32.mxu0 0.0
        %v728 = vand.u32 %v364, 4294901760
        %729 = vmatmul.mubr.f32.gmra.mrb[0].mxu0 %v728
        %v730 = vpop.f32.mrb[0].mxu0
        %v731 = vadd.f32 %v477, %v730
        %v732 = vpop.f32.mrb[0].mxu0
        %v733 = vadd.f32 %v479, %v732
        %734 = vmatprep.mubr.f32.mxu0 0.0
        %v735 = vand.u32 %v365, 4294901760
        %736 = vmatmul.mubr.f32.gmra.mrb[0].mxu0 %v735
        %v737 = vpop.f32.mrb[0].mxu0
        %v738 = vadd.f32 %v488, %v737
        %v739 = vpop.f32.mrb[0].mxu0
        %v740 = vadd.f32 %v490, %v739
        %741 = vmatprep.mubr.f32.mxu0 0.0
        %v742 = vand.u32 %v366, 4294901760
        %743 = vmatmul.mubr.f32.gmra.mrb[0].mxu0 %v742
        %v744 = vpop.f32.mrb[0].mxu0
        %v745 = vadd.f32 %v499, %v744
        %v746 = vpop.f32.mrb[0].mxu0
        %v747 = vadd.f32 %v501, %v746
        %748 = vdwg.mxu0
        %v749 = vand.u32 %v322, 4294901760
        %v750 = vsub.f32 %v322, %v749
        %751 = vmatprep.subr.mxu0 %v750
        %v752 = vand.u32 %v321, 4294901760
        %v753 = vsub.f32 %v321, %v752
        %754 = vmatpush1.msra.mxu0 %v753
        %v755 = vand.u32 %v324, 4294901760
        %v756 = vsub.f32 %v324, %v755
        %757 = vmatprep.subr.mxu0 %v756
        %v758 = vand.u32 %v323, 4294901760
        %v759 = vsub.f32 %v323, %v758
        %760 = vmatpush1.msra.mxu0 %v759
        %v761 = vand.u32 %v326, 4294901760
        %v762 = vsub.f32 %v326, %v761
        %763 = vmatprep.subr.mxu0 %v762
        %v764 = vand.u32 %v325, 4294901760
        %v765 = vsub.f32 %v325, %v764
        %766 = vmatpush1.msra.mxu0 %v765
        %v767 = vand.u32 %v328, 4294901760
        %v768 = vsub.f32 %v328, %v767
        %769 = vmatprep.subr.mxu0 %v768
        %v770 = vand.u32 %v327, 4294901760
        %v771 = vsub.f32 %v327, %v770
        %772 = vmatpush1.msra.mxu0 %v771
        %v773 = vand.u32 %v330, 4294901760
        %v774 = vsub.f32 %v330, %v773
        %775 = vmatprep.subr.mxu0 %v774
        %v776 = vand.u32 %v329, 4294901760
        %v777 = vsub.f32 %v329, %v776
        %778 = vmatpush1.msra.mxu0 %v777
        %v779 = vand.u32 %v332, 4294901760
        %v780 = vsub.f32 %v332, %v779
        %781 = vmatprep.subr.mxu0 %v780
        %v782 = vand.u32 %v331, 4294901760
        %v783 = vsub.f32 %v331, %v782
        %784 = vmatpush1.msra.mxu0 %v783
        %v785 = vand.u32 %v334, 4294901760
        %v786 = vsub.f32 %v334, %v785
        %787 = vmatprep.subr.mxu0 %v786
        %v788 = vand.u32 %v333, 4294901760
        %v789 = vsub.f32 %v333, %v788
        %790 = vmatpush1.msra.mxu0 %v789
        %v791 = vand.u32 %v336, 4294901760
        %v792 = vsub.f32 %v336, %v791
        %793 = vmatprep.subr.mxu0 %v792
        %v794 = vand.u32 %v335, 4294901760
        %v795 = vsub.f32 %v335, %v794
        %796 = vmatpush1.msra.mxu0 %v795
        %v797 = vand.u32 %v338, 4294901760
        %v798 = vsub.f32 %v338, %v797
        %799 = vmatprep.subr.mxu0 %v798
        %v800 = vand.u32 %v337, 4294901760
        %v801 = vsub.f32 %v337, %v800
        %802 = vmatpush1.msra.mxu0 %v801
        %v803 = vand.u32 %v340, 4294901760
        %v804 = vsub.f32 %v340, %v803
        %805 = vmatprep.subr.mxu0 %v804
        %v806 = vand.u32 %v339, 4294901760
        %v807 = vsub.f32 %v339, %v806
        %808 = vmatpush1.msra.mxu0 %v807
        %v809 = vand.u32 %v342, 4294901760
        %v810 = vsub.f32 %v342, %v809
        %811 = vmatprep.subr.mxu0 %v810
        %v812 = vand.u32 %v341, 4294901760
        %v813 = vsub.f32 %v341, %v812
        %814 = vmatpush1.msra.mxu0 %v813
        %v815 = vand.u32 %v344, 4294901760
        %v816 = vsub.f32 %v344, %v815
        %817 = vmatprep.subr.mxu0 %v816
        %v818 = vand.u32 %v343, 4294901760
        %v819 = vsub.f32 %v343, %v818
        %820 = vmatpush1.msra.mxu0 %v819
        %v821 = vand.u32 %v346, 4294901760
        %v822 = vsub.f32 %v346, %v821
        %823 = vmatprep.subr.mxu0 %v822
        %v824 = vand.u32 %v345, 4294901760
        %v825 = vsub.f32 %v345, %v824
        %826 = vmatpush1.msra.mxu0 %v825
        %v827 = vand.u32 %v348, 4294901760
        %v828 = vsub.f32 %v348, %v827
        %829 = vmatprep.subr.mxu0 %v828
        %v830 = vand.u32 %v347, 4294901760
        %v831 = vsub.f32 %v347, %v830
        %832 = vmatpush1.msra.mxu0 %v831
        %v833 = vand.u32 %v350, 4294901760
        %v834 = vsub.f32 %v350, %v833
        %835 = vmatprep.subr.mxu0 %v834
        %v836 = vand.u32 %v349, 4294901760
        %v837 = vsub.f32 %v349, %v836
        %838 = vmatpush1.msra.mxu0 %v837
        %v839 = vand.u32 %v352, 4294901760
        %v840 = vsub.f32 %v352, %v839
        %841 = vmatprep.subr.mxu0 %v840
        %v842 = vand.u32 %v351, 4294901760
        %v843 = vsub.f32 %v351, %v842
        %844 = vmatpush1.msra.mxu0 %v843
        %845 = vmatprep.subr.mxu0 0.0
        %846 = vmatpush1.msra.mxu0 0.0
        %847 = vmatprep.subr.mxu0 0.0
        %848 = vmatpush1.msra.mxu0 0.0
        %849 = vmatprep.subr.mxu0 0.0
        %850 = vmatpush1.msra.mxu0 0.0
        %851 = vmatprep.subr.mxu0 0.0
        %852 = vmatpush1.msra.mxu0 0.0
        %853 = vmatprep.subr.mxu0 0.0
        %854 = vmatpush1.msra.mxu0 0.0
        %855 = vmatprep.subr.mxu0 0.0
        %856 = vmatpush1.msra.mxu0 0.0
        %857 = vmatprep.subr.mxu0 0.0
        %858 = vmatpush1.msra.mxu0 0.0
        %859 = vmatprep.subr.mxu0 0.0
        %860 = vmatpush1.msra.mxu0 0.0
        %861 = vmatprep.subr.mxu0 0.0
        %862 = vmatpush1.msra.mxu0 0.0
        %863 = vmatprep.subr.mxu0 0.0
        %864 = vmatpush1.msra.mxu0 0.0
        %865 = vmatprep.subr.mxu0 0.0
        %866 = vmatpush1.msra.mxu0 0.0
        %867 = vmatprep.subr.mxu0 0.0
        %868 = vmatpush1.msra.mxu0 0.0
        %869 = vmatprep.subr.mxu0 0.0
        %870 = vmatpush1.msra.mxu0 0.0
        %871 = vmatprep.subr.mxu0 0.0
        %872 = vmatpush1.msra.mxu0 0.0
        %873 = vmatprep.subr.mxu0 0.0
        %874 = vmatpush1.msra.mxu0 0.0
        %875 = vmatprep.subr.mxu0 0.0
        %876 = vmatpush1.msra.mxu0 0.0
        %877 = vmatprep.mubr.f32.mxu0 0.0
        %v878 = vand.u32 %v364, 4294901760
        %v879 = vsub.f32 %v364, %v878
        %880 = vmatmul.mubr.f32.gmra.mrb[0].mxu0 %v879
        %v881 = vpop.f32.mrb[0].mxu0
        %v882 = vadd.f32 %v731, %v881
        %v883 = vpop.f32.mrb[0].mxu0
        %v884 = vadd.f32 %v733, %v883
        %885 = vmatprep.mubr.f32.mxu0 0.0
        %v886 = vand.u32 %v365, 4294901760
        %v887 = vsub.f32 %v365, %v886
        %888 = vmatmul.mubr.f32.gmra.mrb[0].mxu0 %v887
        %v889 = vpop.f32.mrb[0].mxu0
        %v890 = vadd.f32 %v738, %v889
        %v891 = vpop.f32.mrb[0].mxu0
        %v892 = vadd.f32 %v740, %v891
        %893 = vmatprep.mubr.f32.mxu0 0.0
        %v894 = vand.u32 %v366, 4294901760
        %v895 = vsub.f32 %v366, %v894
        %896 = vmatmul.mubr.f32.gmra.mrb[0].mxu0 %v895
        %v897 = vpop.f32.mrb[0].mxu0
        %v898 = vadd.f32 %v745, %v897
        %v899 = vpop.f32.mrb[0].mxu0
        %v900 = vadd.f32 %v747, %v899
        %901 = vdwg.mxu0
        %v902 = vand.u32 %v322, 4294901760
        %903 = vmatprep.subr.mxu0 %v902
        %v904 = vand.u32 %v321, 4294901760
        %905 = vmatpush1.msra.mxu0 %v904
        %v906 = vand.u32 %v324, 4294901760
        %907 = vmatprep.subr.mxu0 %v906
        %v908 = vand.u32 %v323, 4294901760
        %909 = vmatpush1.msra.mxu0 %v908
        %v910 = vand.u32 %v326, 4294901760
        %911 = vmatprep.subr.mxu0 %v910
        %v912 = vand.u32 %v325, 4294901760
        %913 = vmatpush1.msra.mxu0 %v912
        %v914 = vand.u32 %v328, 4294901760
        %915 = vmatprep.subr.mxu0 %v914
        %v916 = vand.u32 %v327, 4294901760
        %917 = vmatpush1.msra.mxu0 %v916
        %v918 = vand.u32 %v330, 4294901760
        %919 = vmatprep.subr.mxu0 %v918
        %v920 = vand.u32 %v329, 4294901760
        %921 = vmatpush1.msra.mxu0 %v920
        %v922 = vand.u32 %v332, 4294901760
        %923 = vmatprep.subr.mxu0 %v922
        %v924 = vand.u32 %v331, 4294901760
        %925 = vmatpush1.msra.mxu0 %v924
        %v926 = vand.u32 %v334, 4294901760
        %927 = vmatprep.subr.mxu0 %v926
        %v928 = vand.u32 %v333, 4294901760
        %929 = vmatpush1.msra.mxu0 %v928
        %v930 = vand.u32 %v336, 4294901760
        %931 = vmatprep.subr.mxu0 %v930
        %v932 = vand.u32 %v335, 4294901760
        %933 = vmatpush1.msra.mxu0 %v932
        %v934 = vand.u32 %v338, 4294901760
        %935 = vmatprep.subr.mxu0 %v934
        %v936 = vand.u32 %v337, 4294901760
        %937 = vmatpush1.msra.mxu0 %v936
        %v938 = vand.u32 %v340, 4294901760
        %939 = vmatprep.subr.mxu0 %v938
        %v940 = vand.u32 %v339, 4294901760
        %941 = vmatpush1.msra.mxu0 %v940
        %v942 = vand.u32 %v342, 4294901760
        %943 = vmatprep.subr.mxu0 %v942
        %v944 = vand.u32 %v341, 4294901760
        %945 = vmatpush1.msra.mxu0 %v944
        %v946 = vand.u32 %v344, 4294901760
        %947 = vmatprep.subr.mxu0 %v946
        %v948 = vand.u32 %v343, 4294901760
        %949 = vmatpush1.msra.mxu0 %v948
        %v950 = vand.u32 %v346, 4294901760
        %951 = vmatprep.subr.mxu0 %v950
        %v952 = vand.u32 %v345, 4294901760
        %953 = vmatpush1.msra.mxu0 %v952
        %v954 = vand.u32 %v348, 4294901760
        %955 = vmatprep.subr.mxu0 %v954
        %v956 = vand.u32 %v347, 4294901760
        %957 = vmatpush1.msra.mxu0 %v956
        %v958 = vand.u32 %v350, 4294901760
        %959 = vmatprep.subr.mxu0 %v958
        %v960 = vand.u32 %v349, 4294901760
        %961 = vmatpush1.msra.mxu0 %v960
        %v962 = vand.u32 %v352, 4294901760
        %963 = vmatprep.subr.mxu0 %v962
        %v964 = vand.u32 %v351, 4294901760
        %965 = vmatpush1.msra.mxu0 %v964
        %966 = vmatprep.subr.mxu0 0.0
        %967 = vmatpush1.msra.mxu0 0.0
        %968 = vmatprep.subr.mxu0 0.0
        %969 = vmatpush1.msra.mxu0 0.0
        %970 = vmatprep.subr.mxu0 0.0
        %971 = vmatpush1.msra.mxu0 0.0
        %972 = vmatprep.subr.mxu0 0.0
        %973 = vmatpush1.msra.mxu0 0.0
        %974 = vmatprep.subr.mxu0 0.0
        %975 = vmatpush1.msra.mxu0 0.0
        %976 = vmatprep.subr.mxu0 0.0
        %977 = vmatpush1.msra.mxu0 0.0
        %978 = vmatprep.subr.mxu0 0.0
        %979 = vmatpush1.msra.mxu0 0.0
        %980 = vmatprep.subr.mxu0 0.0
        %981 = vmatpush1.msra.mxu0 0.0
        %982 = vmatprep.subr.mxu0 0.0
        %983 = vmatpush1.msra.mxu0 0.0
        %984 = vmatprep.subr.mxu0 0.0
        %985 = vmatpush1.msra.mxu0 0.0
        %986 = vmatprep.subr.mxu0 0.0
        %987 = vmatpush1.msra.mxu0 0.0
        %988 = vmatprep.subr.mxu0 0.0
        %989 = vmatpush1.msra.mxu0 0.0
        %990 = vmatprep.subr.mxu0 0.0
        %991 = vmatpush1.msra.mxu0 0.0
        %992 = vmatprep.subr.mxu0 0.0
        %993 = vmatpush1.msra.mxu0 0.0
        %994 = vmatprep.subr.mxu0 0.0
        %995 = vmatpush1.msra.mxu0 0.0
        %996 = vmatprep.subr.mxu0 0.0
        %997 = vmatpush1.msra.mxu0 0.0
        %998 = vmatprep.mubr.f32.mxu0 0.0
        %v999 = vand.u32 %v364, 4294901760
        %v1000 = vsub.f32 %v364, %v999
        %v1001 = vand.u32 %v1000, 4294901760
        %1002 = vmatmul.mubr.f32.gmra.mrb[0].mxu0 %v1001
        %v1003 = vpop.f32.mrb[0].mxu0
        %v1004 = vadd.f32 %v882, %v1003
        %v1005 = vpop.f32.mrb[0].mxu0
        %v1006 = vadd.f32 %v884, %v1005
        %1007 = vmatprep.mubr.f32.mxu0 0.0
        %v1008 = vand.u32 %v365, 4294901760
        %v1009 = vsub.f32 %v365, %v1008
        %v1010 = vand.u32 %v1009, 4294901760
        %1011 = vmatmul.mubr.f32.gmra.mrb[0].mxu0 %v1010
        %v1012 = vpop.f32.mrb[0].mxu0
        %v1013 = vadd.f32 %v890, %v1012
        %v1014 = vpop.f32.mrb[0].mxu0
        %v1015 = vadd.f32 %v892, %v1014
        %1016 = vmatprep.mubr.f32.mxu0 0.0
        %v1017 = vand.u32 %v366, 4294901760
        %v1018 = vsub.f32 %v366, %v1017
        %v1019 = vand.u32 %v1018, 4294901760
        %1020 = vmatmul.mubr.f32.gmra.mrb[0].mxu0 %v1019
        %v1021 = vpop.f32.mrb[0].mxu0
        %v1022 = vadd.f32 %v898, %v1021
        %v1023 = vpop.f32.mrb[0].mxu0
        %v1024 = vadd.f32 %v900, %v1023
        %1025 = vdwg.mxu0
        %v1026 = vand.u32 %v322, 4294901760
        %v1027 = vsub.f32 %v322, %v1026
        %v1028 = vand.u32 %v1027, 4294901760
        %1029 = vmatprep.subr.mxu0 %v1028
        %v1030 = vand.u32 %v321, 4294901760
        %v1031 = vsub.f32 %v321, %v1030
        %v1032 = vand.u32 %v1031, 4294901760
        %1033 = vmatpush1.msra.mxu0 %v1032
        %v1034 = vand.u32 %v324, 4294901760
        %v1035 = vsub.f32 %v324, %v1034
        %v1036 = vand.u32 %v1035, 4294901760
        %1037 = vmatprep.subr.mxu0 %v1036
        %v1038 = vand.u32 %v323, 4294901760
        %v1039 = vsub.f32 %v323, %v1038
        %v1040 = vand.u32 %v1039, 4294901760
        %1041 = vmatpush1.msra.mxu0 %v1040
        %v1042 = vand.u32 %v326, 4294901760
        %v1043 = vsub.f32 %v326, %v1042
        %v1044 = vand.u32 %v1043, 4294901760
        %1045 = vmatprep.subr.mxu0 %v1044
        %v1046 = vand.u32 %v325, 4294901760
        %v1047 = vsub.f32 %v325, %v1046
        %v1048 = vand.u32 %v1047, 4294901760
        %1049 = vmatpush1.msra.mxu0 %v1048
        %v1050 = vand.u32 %v328, 4294901760
        %v1051 = vsub.f32 %v328, %v1050
        %v1052 = vand.u32 %v1051, 4294901760
        %1053 = vmatprep.subr.mxu0 %v1052
        %v1054 = vand.u32 %v327, 4294901760
        %v1055 = vsub.f32 %v327, %v1054
        %v1056 = vand.u32 %v1055, 4294901760
        %1057 = vmatpush1.msra.mxu0 %v1056
        %v1058 = vand.u32 %v330, 4294901760
        %v1059 = vsub.f32 %v330, %v1058
        %v1060 = vand.u32 %v1059, 4294901760
        %1061 = vmatprep.subr.mxu0 %v1060
        %v1062 = vand.u32 %v329, 4294901760
        %v1063 = vsub.f32 %v329, %v1062
        %v1064 = vand.u32 %v1063, 4294901760
        %1065 = vmatpush1.msra.mxu0 %v1064
        %v1066 = vand.u32 %v332, 4294901760
        %v1067 = vsub.f32 %v332, %v1066
        %v1068 = vand.u32 %v1067, 4294901760
        %1069 = vmatprep.subr.mxu0 %v1068
        %v1070 = vand.u32 %v331, 4294901760
        %v1071 = vsub.f32 %v331, %v1070
        %v1072 = vand.u32 %v1071, 4294901760
        %1073 = vmatpush1.msra.mxu0 %v1072
        %v1074 = vand.u32 %v334, 4294901760
        %v1075 = vsub.f32 %v334, %v1074
        %v1076 = vand.u32 %v1075, 4294901760
        %1077 = vmatprep.subr.mxu0 %v1076
        %v1078 = vand.u32 %v333, 4294901760
        %v1079 = vsub.f32 %v333, %v1078
        %v1080 = vand.u32 %v1079, 4294901760
        %1081 = vmatpush1.msra.mxu0 %v1080
        %v1082 = vand.u32 %v336, 4294901760
        %v1083 = vsub.f32 %v336, %v1082
        %v1084 = vand.u32 %v1083, 4294901760
        %1085 = vmatprep.subr.mxu0 %v1084
        %v1086 = vand.u32 %v335, 4294901760
        %v1087 = vsub.f32 %v335, %v1086
        %v1088 = vand.u32 %v1087, 4294901760
        %1089 = vmatpush1.msra.mxu0 %v1088
        %v1090 = vand.u32 %v338, 4294901760
        %v1091 = vsub.f32 %v338, %v1090
        %v1092 = vand.u32 %v1091, 4294901760
        %1093 = vmatprep.subr.mxu0 %v1092
        %v1094 = vand.u32 %v337, 4294901760
        %v1095 = vsub.f32 %v337, %v1094
        %v1096 = vand.u32 %v1095, 4294901760
        %1097 = vmatpush1.msra.mxu0 %v1096
        %v1098 = vand.u32 %v340, 4294901760
        %v1099 = vsub.f32 %v340, %v1098
        %v1100 = vand.u32 %v1099, 4294901760
        %1101 = vmatprep.subr.mxu0 %v1100
        %v1102 = vand.u32 %v339, 4294901760
        %v1103 = vsub.f32 %v339, %v1102
        %v1104 = vand.u32 %v1103, 4294901760
        %1105 = vmatpush1.msra.mxu0 %v1104
        %v1106 = vand.u32 %v342, 4294901760
        %v1107 = vsub.f32 %v342, %v1106
        %v1108 = vand.u32 %v1107, 4294901760
        %1109 = vmatprep.subr.mxu0 %v1108
        %v1110 = vand.u32 %v341, 4294901760
        %v1111 = vsub.f32 %v341, %v1110
        %v1112 = vand.u32 %v1111, 4294901760
        %1113 = vmatpush1.msra.mxu0 %v1112
        %v1114 = vand.u32 %v344, 4294901760
        %v1115 = vsub.f32 %v344, %v1114
        %v1116 = vand.u32 %v1115, 4294901760
        %1117 = vmatprep.subr.mxu0 %v1116
        %v1118 = vand.u32 %v343, 4294901760
        %v1119 = vsub.f32 %v343, %v1118
        %v1120 = vand.u32 %v1119, 4294901760
        %1121 = vmatpush1.msra.mxu0 %v1120
        %v1122 = vand.u32 %v346, 4294901760
        %v1123 = vsub.f32 %v346, %v1122
        %v1124 = vand.u32 %v1123, 4294901760
        %1125 = vmatprep.subr.mxu0 %v1124
        %v1126 = vand.u32 %v345, 4294901760
        %v1127 = vsub.f32 %v345, %v1126
        %v1128 = vand.u32 %v1127, 4294901760
        %1129 = vmatpush1.msra.mxu0 %v1128
        %v1130 = vand.u32 %v348, 4294901760
        %v1131 = vsub.f32 %v348, %v1130
        %v1132 = vand.u32 %v1131, 4294901760
        %1133 = vmatprep.subr.mxu0 %v1132
        %v1134 = vand.u32 %v347, 4294901760
        %v1135 = vsub.f32 %v347, %v1134
        %v1136 = vand.u32 %v1135, 4294901760
        %1137 = vmatpush1.msra.mxu0 %v1136
        %v1138 = vand.u32 %v350, 4294901760
        %v1139 = vsub.f32 %v350, %v1138
        %v1140 = vand.u32 %v1139, 4294901760
        %1141 = vmatprep.subr.mxu0 %v1140
        %v1142 = vand.u32 %v349, 4294901760
        %v1143 = vsub.f32 %v349, %v1142
        %v1144 = vand.u32 %v1143, 4294901760
        %1145 = vmatpush1.msra.mxu0 %v1144
        %v1146 = vand.u32 %v352, 4294901760
        %v1147 = vsub.f32 %v352, %v1146
        %v1148 = vand.u32 %v1147, 4294901760
        %1149 = vmatprep.subr.mxu0 %v1148
        %v1150 = vand.u32 %v351, 4294901760
        %v1151 = vsub.f32 %v351, %v1150
        %v1152 = vand.u32 %v1151, 4294901760
        %1153 = vmatpush1.msra.mxu0 %v1152
        %1154 = vmatprep.subr.mxu0 0.0
        %1155 = vmatpush1.msra.mxu0 0.0
        %1156 = vmatprep.subr.mxu0 0.0
        %1157 = vmatpush1.msra.mxu0 0.0
        %1158 = vmatprep.subr.mxu0 0.0
        %1159 = vmatpush1.msra.mxu0 0.0
        %1160 = vmatprep.subr.mxu0 0.0
        %1161 = vmatpush1.msra.mxu0 0.0
        %1162 = vmatprep.subr.mxu0 0.0
        %1163 = vmatpush1.msra.mxu0 0.0
        %1164 = vmatprep.subr.mxu0 0.0
        %1165 = vmatpush1.msra.mxu0 0.0
        %1166 = vmatprep.subr.mxu0 0.0
        %1167 = vmatpush1.msra.mxu0 0.0
        %1168 = vmatprep.subr.mxu0 0.0
        %1169 = vmatpush1.msra.mxu0 0.0
        %1170 = vmatprep.subr.mxu0 0.0
        %1171 = vmatpush1.msra.mxu0 0.0
        %1172 = vmatprep.subr.mxu0 0.0
        %1173 = vmatpush1.msra.mxu0 0.0
        %1174 = vmatprep.subr.mxu0 0.0
        %1175 = vmatpush1.msra.mxu0 0.0
        %1176 = vmatprep.subr.mxu0 0.0
        %1177 = vmatpush1.msra.mxu0 0.0
        %1178 = vmatprep.subr.mxu0 0.0
        %1179 = vmatpush1.msra.mxu0 0.0
        %1180 = vmatprep.subr.mxu0 0.0
        %1181 = vmatpush1.msra.mxu0 0.0
        %1182 = vmatprep.subr.mxu0 0.0
        %1183 = vmatpush1.msra.mxu0 0.0
        %1184 = vmatprep.subr.mxu0 0.0
        %1185 = vmatpush1.msra.mxu0 0.0
        %1186 = vmatprep.mubr.f32.mxu0 0.0
        %v1187 = vand.u32 %v364, 4294901760
        %1188 = vmatmul.mubr.f32.gmra.mrb[0].mxu0 %v1187
        %v1189 = vpop.f32.mrb[0].mxu0
        %v1190 = vadd.f32 %v1004, %v1189
        %v1191 = vpop.f32.mrb[0].mxu0
        %v1192 = vadd.f32 %v1006, %v1191
        %1193 = vmatprep.mubr.f32.mxu0 0.0
        %v1194 = vand.u32 %v365, 4294901760
        %1195 = vmatmul.mubr.f32.gmra.mrb[0].mxu0 %v1194
        %v1196 = vpop.f32.mrb[0].mxu0
        %v1197 = vadd.f32 %v1013, %v1196
        %v1198 = vpop.f32.mrb[0].mxu0
        %v1199 = vadd.f32 %v1015, %v1198
        %1200 = vmatprep.mubr.f32.mxu0 0.0
        %v1201 = vand.u32 %v366, 4294901760
        %1202 = vmatmul.mubr.f32.gmra.mrb[0].mxu0 %v1201
        %v1203 = vpop.f32.mrb[0].mxu0
        %v1204 = vadd.f32 %v1022, %v1203
        %v1205 = vpop.f32.mrb[0].mxu0
        %v1206 = vadd.f32 %v1024, %v1205
        %1207 = vdwg.mxu0
        %v1208 = vand.u32 %v322, 4294901760
        %1209 = vmatprep.subr.mxu0 %v1208
        %v1210 = vand.u32 %v321, 4294901760
        %1211 = vmatpush1.msra.mxu0 %v1210
        %v1212 = vand.u32 %v324, 4294901760
        %1213 = vmatprep.subr.mxu0 %v1212
        %v1214 = vand.u32 %v323, 4294901760
        %1215 = vmatpush1.msra.mxu0 %v1214
        %v1216 = vand.u32 %v326, 4294901760
        %1217 = vmatprep.subr.mxu0 %v1216
        %v1218 = vand.u32 %v325, 4294901760
        %1219 = vmatpush1.msra.mxu0 %v1218
        %v1220 = vand.u32 %v328, 4294901760
        %1221 = vmatprep.subr.mxu0 %v1220
        %v1222 = vand.u32 %v327, 4294901760
        %1223 = vmatpush1.msra.mxu0 %v1222
        %v1224 = vand.u32 %v330, 4294901760
        %1225 = vmatprep.subr.mxu0 %v1224
        %v1226 = vand.u32 %v329, 4294901760
        %1227 = vmatpush1.msra.mxu0 %v1226
        %v1228 = vand.u32 %v332, 4294901760
        %1229 = vmatprep.subr.mxu0 %v1228
        %v1230 = vand.u32 %v331, 4294901760
        %1231 = vmatpush1.msra.mxu0 %v1230
        %v1232 = vand.u32 %v334, 4294901760
        %1233 = vmatprep.subr.mxu0 %v1232
        %v1234 = vand.u32 %v333, 4294901760
        %1235 = vmatpush1.msra.mxu0 %v1234
        %v1236 = vand.u32 %v336, 4294901760
        %1237 = vmatprep.subr.mxu0 %v1236
        %v1238 = vand.u32 %v335, 4294901760
        %1239 = vmatpush1.msra.mxu0 %v1238
        %v1240 = vand.u32 %v338, 4294901760
        %1241 = vmatprep.subr.mxu0 %v1240
        %v1242 = vand.u32 %v337, 4294901760
        %1243 = vmatpush1.msra.mxu0 %v1242
        %v1244 = vand.u32 %v340, 4294901760
        %1245 = vmatprep.subr.mxu0 %v1244
        %v1246 = vand.u32 %v339, 4294901760
        %1247 = vmatpush1.msra.mxu0 %v1246
        %v1248 = vand.u32 %v342, 4294901760
        %1249 = vmatprep.subr.mxu0 %v1248
        %v1250 = vand.u32 %v341, 4294901760
        %1251 = vmatpush1.msra.mxu0 %v1250
        %v1252 = vand.u32 %v344, 4294901760
        %1253 = vmatprep.subr.mxu0 %v1252
        %v1254 = vand.u32 %v343, 4294901760
        %1255 = vmatpush1.msra.mxu0 %v1254
        %v1256 = vand.u32 %v346, 4294901760
        %1257 = vmatprep.subr.mxu0 %v1256
        %v1258 = vand.u32 %v345, 4294901760
        %1259 = vmatpush1.msra.mxu0 %v1258
        %v1260 = vand.u32 %v348, 4294901760
        %1261 = vmatprep.subr.mxu0 %v1260
        %v1262 = vand.u32 %v347, 4294901760
        %1263 = vmatpush1.msra.mxu0 %v1262
        %v1264 = vand.u32 %v350, 4294901760
        %1265 = vmatprep.subr.mxu0 %v1264
        %v1266 = vand.u32 %v349, 4294901760
        %1267 = vmatpush1.msra.mxu0 %v1266
        %v1268 = vand.u32 %v352, 4294901760
        %1269 = vmatprep.subr.mxu0 %v1268
        %v1270 = vand.u32 %v351, 4294901760
        %1271 = vmatpush1.msra.mxu0 %v1270
        %1272 = vmatprep.subr.mxu0 0.0
        %1273 = vmatpush1.msra.mxu0 0.0
        %1274 = vmatprep.subr.mxu0 0.0
        %1275 = vmatpush1.msra.mxu0 0.0
        %1276 = vmatprep.subr.mxu0 0.0
        %1277 = vmatpush1.msra.mxu0 0.0
        %1278 = vmatprep.subr.mxu0 0.0
        %1279 = vmatpush1.msra.mxu0 0.0
        %1280 = vmatprep.subr.mxu0 0.0
        %1281 = vmatpush1.msra.mxu0 0.0
        %1282 = vmatprep.subr.mxu0 0.0
        %1283 = vmatpush1.msra.mxu0 0.0
        %1284 = vmatprep.subr.mxu0 0.0
        %1285 = vmatpush1.msra.mxu0 0.0
        %1286 = vmatprep.subr.mxu0 0.0
        %1287 = vmatpush1.msra.mxu0 0.0
        %1288 = vmatprep.subr.mxu0 0.0
        %1289 = vmatpush1.msra.mxu0 0.0
        %1290 = vmatprep.subr.mxu0 0.0
        %1291 = vmatpush1.msra.mxu0 0.0
        %1292 = vmatprep.subr.mxu0 0.0
        %1293 = vmatpush1.msra.mxu0 0.0
        %1294 = vmatprep.subr.mxu0 0.0
        %1295 = vmatpush1.msra.mxu0 0.0
        %1296 = vmatprep.subr.mxu0 0.0
        %1297 = vmatpush1.msra.mxu0 0.0
        %1298 = vmatprep.subr.mxu0 0.0
        %1299 = vmatpush1.msra.mxu0 0.0
        %1300 = vmatprep.subr.mxu0 0.0
        %1301 = vmatpush1.msra.mxu0 0.0
        %1302 = vmatprep.subr.mxu0 0.0
        %1303 = vmatpush1.msra.mxu0 0.0
        %1304 = vmatprep.mubr.f32.mxu0 0.0
        %v1305 = vand.u32 %v364, 4294901760
        %1306 = vmatmul.mubr.f32.gmra.mrb[0].mxu0 %v1305
        %v1307 = vpop.f32.mrb[0].mxu0
        %v1308 = vadd.f32 %v1190, %v1307
        %v1309 = vpop.f32.mrb[0].mxu0
        %v1310 = vadd.f32 %v1192, %v1309
        %1311 = vmatprep.mubr.f32.mxu0 0.0
        %v1312 = vand.u32 %v365, 4294901760
        %1313 = vmatmul.mubr.f32.gmra.mrb[0].mxu0 %v1312
        %v1314 = vpop.f32.mrb[0].mxu0
        %v1315 = vadd.f32 %v1197, %v1314
        %v1316 = vpop.f32.mrb[0].mxu0
        %v1317 = vadd.f32 %v1199, %v1316
        %1318 = vmatprep.mubr.f32.mxu0 0.0
        %v1319 = vand.u32 %v366, 4294901760
        %1320 = vmatmul.mubr.f32.gmra.mrb[0].mxu0 %v1319
        %v1321 = vpop.f32.mrb[0].mxu0
        %v1322 = vadd.f32 %v1204, %v1321
        %v1323 = vpop.f32.mrb[0].mxu0
        %v1324 = vadd.f32 %v1206, %v1323
        %1325 = vdwg.mxu0
        %v1326 = vadd.f32 %v367, %v1308
        %v1327 = vadd.f32 %v368, %v1310
        %v1328 = vadd.f32 %v369, %v1315
        %v1329 = vadd.f32 %v370, %v1317
        %v1330 = vadd.f32 %v371, %v1322
        %v1331 = vadd.f32 %v372, %v1324
        %1332 = vst [vmem:[#allocation5] sm:$0xff] %v1326
        %1333 = vst [vmem:[#allocation5 + $0x8] sm:$0xff] %v1327
        %1334 = vst [vmem:[#allocation5 + $0x10] sm:$0xff] %v1328
        %1335 = vst [vmem:[#allocation5 + $0x18] sm:$0xff] %v1329
        %1336 = vst [vmem:[#allocation5 + $0x20] sm:$0xff] %v1330
        %1337 = vst [vmem:[#allocation5 + $0x28] sm:$0xff] %v1331
        %p1338 = scmp.eq.s32.totalorder %s23, 2
        // Predicated region
        $region41: #{tpu_custom_call.1} parent=31 // pred_check
          %p1339 = pneg %p1338
        $region42: #{tpu_custom_call.1} parent=31 // pred_check_branch
          %1341 = sbr.rel (%p1339) target = $region44
        $region43: #{tpu_custom_call.1} parent=31 // pred_region
          %v1342 = vld [vmem:[#allocation5] sm:$0xff]
          %v1343 = vld [vmem:[#allocation5 + $0x8] sm:$0xff]
          %v1344 = vld [vmem:[#allocation5 + $0x10] sm:$0xff]
          %v1345 = vld [vmem:[#allocation5 + $0x18] sm:$0xff]
          %v1346 = vld [vmem:[#allocation5 + $0x20] sm:$0xff]
          %v1347 = vld [vmem:[#allocation5 + $0x28] sm:$0xff]
          %v1348 = vld [vmem:[%s2] sm:$0xff]
          %v1349 = vld [vmem:[%s2 + $0x8] sm:$0xff]
          %v1350 = vld [vmem:[%s2 + $0x10] sm:$0xff]
          %1352 = vset.pattern.permute.xlu0 0
          %1353 = vperm.xlu0 %1352, %v1348
          %v1354 = vpop.permute.xlu0 %1353
          %1357 = vset.pattern.permute.xlu0 0
          %1358 = vperm.xlu0 %1357, %v1349
          %v1359 = vpop.permute.xlu0 %1358
          %1362 = vset.pattern.permute.xlu0 0
          %1363 = vperm.xlu0 %1362, %v1350
          %v1364 = vpop.permute.xlu0 %1363
          %v1366 = vmul.f32 %v1342, %v1354
          %v1367 = vmul.f32 %v1343, %v1354
          %v1368 = vmul.f32 %v1344, %v1359
          %v1369 = vmul.f32 %v1345, %v1359
          %v1370 = vmul.f32 %v1346, %v1364
          %v1371 = vmul.f32 %v1347, %v1364
          %v1372 = vmul.f32 %v1366, %v1366
          %v1373 = vmul.f32 %v1367, %v1367
          %v1374 = vmul.f32 %v1368, %v1368
          %v1375 = vmul.f32 %v1369, %v1369
          %v1376 = vmul.f32 %v1370, %v1370
          %v1377 = vmul.f32 %v1371, %v1371
          %v1378 = vadd.f32 %v1372, %v1373
          %1379 = vadd.xlane.f32.xlu0 %v1378
          %v1380 = vpop.xlane.xlu0 %1379
          %v1381 = vadd.f32 %v1374, %v1375
          %1382 = vadd.xlane.f32.xlu0 %v1381
          %v1383 = vpop.xlane.xlu0 %1382
          %v1384 = vadd.f32 %v1376, %v1377
          %1385 = vadd.xlane.f32.xlu0 %v1384
          %v1386 = vpop.xlane.xlu0 %1385
          %v1387 = vmax.f32 %v1380, 1e-24
          %v1388 = vmax.f32 %v1383, 1e-24
          %v1389 = vmax.f32 %v1386, 1e-24
          %v1390 = vrsqrt.pop %v1387
          %v1391 = vrsqrt.pop %v1388
          %v1392 = vrsqrt.pop %v1389
          %v1393 = vmul.f32 %v1366, %v1390
          %v1394 = vmul.f32 %v1367, %v1390
          %v1395 = vmul.f32 %v1368, %v1391
          %v1396 = vmul.f32 %v1369, %v1391
          %v1397 = vmul.f32 %v1370, %v1392
          %v1398 = vmul.f32 %v1371, %v1392
          %1399 = vst [vmem:[#allocation5] sm:$0xff] %v1393
          %1400 = vst [vmem:[#allocation5 + $0x8] sm:$0xff] %v1394
          %1401 = vst [vmem:[#allocation5 + $0x10] sm:$0xff] %v1395
          %1402 = vst [vmem:[#allocation5 + $0x18] sm:$0xff] %v1396
          %1403 = vst [vmem:[#allocation5 + $0x20] sm:$0xff] %v1397
          %1404 = vst [vmem:[#allocation5 + $0x28] sm:$0xff] %v1398
        $region44: #{tpu_custom_call.1} parent=31 // pred_fallthru
          _
        // Predicated region
        $region45: #{tpu_custom_call.1} parent=31 // pred_check
          %p1405 = pneg %p123
        $region46: #{tpu_custom_call.1} parent=31 // pred_check_branch
          %1407 = sbr.rel (%p1405) target = $region48
        $region47: #{tpu_custom_call.1} parent=31 // pred_region
          %s1408 = smul.u32 2, %s22
          %s1410 = ssub.s32 768, 768
          %1411 = vsyncadd [#allocation4], %s1410
          %s1412 = smul.addr %s1408, 128
          %s1413 = scalar_lea.hbm %s3, %s1412
          %s1414 = sshll.u32 [#allocation5], 4
          %s1415 = int_to_ptr.vmem [resolvable:$true] %s1414
          %1420 = dma.vmem_to_hbm [thread:$0]  %s1415, 768, %s1413, [#allocation4], 256, 256, 16
        $region48: #{tpu_custom_call.1} parent=31 // pred_fallthru
          _
        // Predicated region
        $region49: #{tpu_custom_call.1} parent=31 // pred_check
          %p1421 = pneg %p123
        $region50: #{tpu_custom_call.1} parent=31 // pred_check_branch
          %1423 = sbr.rel (%p1421) target = $region52
        $region51: #{tpu_custom_call.1} parent=31 // pred_region
          %1424 = dma.done [#allocation4], 768
        $region52: #{tpu_custom_call.1} parent=31 // pred_fallthru
          _
      $region32: #{tpu_custom_call.1} parent=5 // pred_fallthru
        _
      %p1425 = scmp.le.s32.totalorder 2, %s13
      // Predicated region
      $region53: #{tpu_custom_call.1} parent=5 // pred_check
        %p1426 = pneg %p1425
      $region54: #{tpu_custom_call.1} parent=5 // pred_check_branch
        %1428 = sbr.rel (%p1426) target = $region56
      $region55: #{tpu_custom_call.1} parent=5 // pred_region
        %s1429 = ssub.s32 %s13, 2
      $region56: #{tpu_custom_call.1} parent=5 // pred_fallthru
        _
    $region6: #{tpu_custom_call.1} parent=1 // loop_footer
      %s17 = sadd.s32 1, %s13
    $region7: #{tpu_custom_call.1} parent=1 // loop_footer_branch
      %12 = sbr.rel target = $region3
    $region8: #{tpu_custom_call.1} parent=1 // loop_exit
      _
    %1430 = vsyncpa [#allocation3], 1
    %s1431 = scalar_lea.sflag [#allocation3], 1
    %1432 = vsyncpa %s1431, 1
    %1433 = vsyncpa [#allocation4], 1
    %s1434 = scalar_lea.sflag [#allocation4], 1
    %1435 = vsyncpa %s1434, 1

</llo_original>
